<compile_context>
chip_gen: v7x
topology: tpu7x:2x2x1
jax: 0.10.0
libtpu: 0.0.40
codegen_flags: <defaults>
</compile_context>

<pallas_src>
import functools

import jax
import jax.numpy as jnp
from jax import lax
from jax.experimental import pallas as pl
from jax.experimental.pallas import tpu as pltpu


def _mpnn_kernel(mask_ref, nodes_ref, edge_part_ref,
                 w_msg_n_ref, w_upd_h_ref, w_upd_m_ref, b_upd_ref,
                 w_out_h_ref, w_out_x_ref, b_out_ref,
                 out_ref, neigh_scr, *, message_passes, w_chunk):
    Bt, N, Fn = nodes_ref.shape
    M = w_msg_n_ref.shape[1]
    O = w_out_h_ref.shape[1]
    Wt = w_chunk
    n_chunks = N // Wt

    nodes_flat = nodes_ref[...].reshape(Bt * N, Fn)     # leading-dim merge (free)
    node_mask = mask_ref[...].reshape(Bt * N, 1)        # (Bt*N, 1); >0 where deg>0

    w_msg_n = w_msg_n_ref[...]
    w_upd_h = w_upd_h_ref[...]
    w_upd_m = w_upd_m_ref[...]
    b_upd = b_upd_ref[...]
    w_out_h = w_out_h_ref[...]
    w_out_x = w_out_x_ref[...]
    b_out = b_out_ref[...]

    hidden = nodes_flat

    for _ in range(message_passes):
        # Neighbour-hidden contribution W_n h_w, shared across all v for a given w.
        neigh_scr[...] = jnp.dot(hidden, w_msg_n,
                                 preferred_element_type=jnp.float32
                                 ).reshape(Bt, N, M)

        def chunk_body(c, msgs):
            # The message bias and an additive -1e30*(1-adj) neighbour mask are
            # pre-folded into edge_part, so per chunk this is: upcast, add, relu,
            # sublane-reduce — no (Bt,N,N,M) temporary is ever live.
            w0 = c * Wt
            if Wt % 8 == 0:
                w0 = pl.multiple_of(w0, 8)
            ep = edge_part_ref[:, :, pl.ds(w0, Wt), :].astype(jnp.float32)  # (Bt,N,Wt,M)
            ng = neigh_scr[:, pl.ds(w0, Wt), :]                             # (Bt,Wt,M)
            pre = jnp.maximum(ep + ng[:, None, :, :], 0.0)
            return msgs + jnp.sum(pre, axis=2)                              # (Bt,N,M)

        messages = lax.fori_loop(0, n_chunks, chunk_body,
                                 jnp.zeros((Bt, N, M), jnp.float32),
                                 unroll=(n_chunks <= 4))

        # update: two accumulating MXU dots (no scratch concat).
        new_hidden = jnp.maximum(
            jnp.dot(hidden, w_upd_h, preferred_element_type=jnp.float32)
            + jnp.dot(messages.reshape(Bt * N, M), w_upd_m,
                      preferred_element_type=jnp.float32)
            + b_upd, 0.0)
        # Degree-0 nodes keep their input state (matches the nonzero() packing).
        hidden = jnp.where(node_mask > 0.0, new_hidden, hidden)

    # readout: two accumulating MXU dots, masked node sum.
    per_node = jnp.maximum(
        jnp.dot(hidden, w_out_h, preferred_element_type=jnp.float32)
        + jnp.dot(nodes_flat, w_out_x, preferred_element_type=jnp.float32)
        + b_out, 0.0)                                   # (Bt*N, O)
    per_node = jnp.where(node_mask > 0.0, per_node, 0.0)
    out_ref[...] = jnp.sum(per_node.reshape(Bt, N, O), axis=1)   # (Bt, O)


def _vmem_capacity_bytes():
    try:
        cap = int(pltpu.get_tpu_info().vmem_capacity_bytes)
        if cap > 0:
            return cap
    except Exception:
        pass
    return 64 * 1024 * 1024   # v7x-safe fallback


def _pick_w_chunk(N, M):
    """Divisor of N for the neighbour-chunk width; sublane-aligned where possible,
    bounded so the per-chunk f32 temporary stays small."""
    divisors = [d for d in range(1, N + 1) if N % d == 0]
    target = max(1, 2048 // max(M, 1))
    good = [d for d in divisors if d <= target and (d % 8 == 0 or d == N or N < 8)]
    if good:
        return max(good)
    small = [d for d in divisors if d <= target]
    return max(small) if small else min(divisors)


def _vmem_bytes(Bt, N, M, Fn, O, Wt, edge_bytes):
    """Rough per-grid-step VMEM estimate for block size Bt."""
    edge_block = Bt * N * N * M * edge_bytes
    nodes_block = Bt * N * Fn * 4
    mask_block = Bt * N * 4
    out_block = Bt * O * 4
    weights = (Fn * M + Fn * Fn + M * Fn + Fn + 2 * Fn * O + O) * 4
    pipelined = 2 * (edge_block + nodes_block + mask_block + out_block + weights)
    temps = Bt * N * (3 * Fn + 3 * M + O) * 4 + 2 * Bt * N * Wt * M * 4
    return pipelined + temps


def _pick_block_b(B, bytes_fn, budget):
    """Largest batch block that (a) tiles legally ((8,128) rule on the (B,O) output),
    (b) fits the VMEM budget, preferring >= 2 grid steps for megacore."""
    cands = [d for d in range(1, B + 1) if B % d == 0 and (d % 8 == 0 or d == B)]
    fitting = [d for d in cands if bytes_fn(d) <= budget] or [min(cands)]
    multi = [d for d in fitting if B // d >= 2]
    return max(multi) if multi else max(fitting)


def aggregation_mpnn_forward(adjacency, nodes, edges, params, *, message_passes,
                             block_b=None, edge_storage_dtype=jnp.bfloat16):
    B, N, Fn = nodes.shape
    M = params["w_msg_n"].shape[-1]
    O = params["w_out_h"].shape[-1]

    # Node mask (deg > 0) computed once; the full adjacency never enters kernel VMEM.
    node_mask = (jnp.sum(adjacency, axis=-1, keepdims=True) > 0).astype(jnp.float32)

    # Precompute the edge contribution on the MXU (plain XLA einsum); fold in the
    # message bias and an additive -1e30 neighbour mask (binary adjacency), store bf16.
    edge_part = (jnp.einsum('bvwe,em->bvwm', edges, params["w_msg_e"])
                 + params["b_msg"]
                 + (adjacency - 1.0)[..., None] * jnp.float32(1e30))
    edge_part = edge_part.astype(edge_storage_dtype)                 # (B, N, N, M)

    Wt = _pick_w_chunk(N, M)
    edge_bytes = jnp.dtype(edge_storage_dtype).itemsize
    bytes_fn = functools.partial(_vmem_bytes, N=N, M=M, Fn=Fn, O=O, Wt=Wt,
                                 edge_bytes=edge_bytes)
    cap = _vmem_capacity_bytes()
    budget = int(0.55 * cap)
    Bt = block_b if block_b is not None else _pick_block_b(B, bytes_fn, budget)
    assert B % Bt == 0
    vmem_limit = int(min(int(0.9 * cap), max(int(1.2 * bytes_fn(Bt)), 24 << 20)))

    kernel = functools.partial(_mpnn_kernel, message_passes=message_passes,
                               w_chunk=Wt)
    rep2 = lambda g: (0, 0)

    grid_spec = pltpu.PrefetchScalarGridSpec(
        num_scalar_prefetch=0,
        grid=(B // Bt,),
        in_specs=[
            pl.BlockSpec((Bt, N, 1), lambda g: (g, 0, 0)),       # node mask
            pl.BlockSpec((Bt, N, Fn), lambda g: (g, 0, 0)),      # nodes
            pl.BlockSpec((Bt, N, N, M), lambda g: (g, 0, 0, 0)), # edge_part (bf16)
            pl.BlockSpec((Fn, M), rep2),                         # W_msg_n
            pl.BlockSpec((Fn, Fn), rep2),                        # W_upd_h
            pl.BlockSpec((M, Fn), rep2),                         # W_upd_m
            pl.BlockSpec((1, Fn), rep2),                         # b_upd
            pl.BlockSpec((Fn, O), rep2),                         # W_out_h
            pl.BlockSpec((Fn, O), rep2),                         # W_out_x
            pl.BlockSpec((1, O), rep2),                          # b_out
        ],
        out_specs=pl.BlockSpec((Bt, O), lambda g: (g, 0)),
        scratch_shapes=[pltpu.VMEM((Bt, N, M), jnp.float32)],    # neigh (W_n h_w)
    )

    out = pl.pallas_call(
        kernel,
        out_shape=jax.ShapeDtypeStruct((B, O), jnp.float32),
        grid_spec=grid_spec,
        compiler_params=pltpu.CompilerParams(
            dimension_semantics=("parallel",),
            vmem_limit_bytes=vmem_limit),
    )(node_mask, nodes, edge_part,
      params["w_msg_n"], params["w_upd_h"], params["w_upd_m"], params["b_upd"],
      params["w_out_h"], params["w_out_x"], params["b_out"])
    return out


def reference_forward(adjacency, nodes, edges, params, *, message_passes,
                      edge_storage_dtype=jnp.float32):
    """Pure-JAX dense restatement of AggregationMPNN.forward (same concrete
    aggregate/update/readout as the kernel), with the same edge_part storage
    rounding, for a correctness check."""
    adj = adjacency
    node_mask = (adj.sum(-1, keepdims=True) > 0).astype(jnp.float32)    # (B, N, 1)
    edge_part = (jnp.einsum('bvwe,em->bvwm', edges, params["w_msg_e"])
                 + params["b_msg"])
    edge_part = edge_part.astype(edge_storage_dtype).astype(jnp.float32)
    hidden = nodes
    for _ in range(message_passes):
        neigh = hidden @ params["w_msg_n"]                               # (B, N, M)
        pre = jax.nn.relu(neigh[:, None, :, :] + edge_part)
        messages = jnp.einsum('bvw,bvwm->bvm', adj, pre)
        new_hidden = jax.nn.relu(hidden @ params["w_upd_h"]
                                 + messages @ params["w_upd_m"]
                                 + params["b_upd"])
        hidden = jnp.where(node_mask > 0, new_hidden, hidden)
    per_node = jax.nn.relu(hidden @ params["w_out_h"]
                           + nodes @ params["w_out_x"]
                           + params["b_out"])
    return jnp.sum(node_mask * per_node, axis=1)


if __name__ == "__main__":
    key = jax.random.PRNGKey(0)
    B, N = 2, 8
    node_features, edge_features = 16, 8
    message_size, message_passes, out_features = 16, 3, 8

    k = jax.random.split(key, 4)
    # Binary, symmetric adjacency with no self loops; leave node N-1 of batch 0
    # isolated to exercise the node mask path (degree == 0 nodes keep input state).
    adj = (jax.random.uniform(k[0], (B, N, N)) > 0.55).astype(jnp.float32)
    adj = jnp.maximum(adj, jnp.transpose(adj, (0, 2, 1)))
    adj = adj * (1.0 - jnp.eye(N, dtype=jnp.float32)[None])
    adj = adj.at[0, N - 1, :].set(0.0).at[0, :, N - 1].set(0.0)

    nodes = jax.random.normal(k[1], (B, N, node_features), dtype=jnp.float32)
    edges = jax.random.normal(k[2], (B, N, N, edge_features), dtype=jnp.float32)
    # Edge features only exist where adjacency is nonzero (mirrors the PyTorch gather).
    edges = edges * adj[..., None]

    def init(kk, shape, scale=0.1):
        return scale * jax.random.normal(kk, shape, dtype=jnp.float32)

    wk = jax.random.split(k[3], 9)
    params = {
        "w_msg_n": init(wk[0], (node_features, message_size)),
        "w_msg_e": init(wk[1], (edge_features, message_size)),
        "b_msg":   init(wk[2], (1, message_size)),
        "w_upd_h": init(wk[3], (node_features, node_features)),
        "w_upd_m": init(wk[4], (message_size, node_features)),
        "b_upd":   init(wk[5], (1, node_features)),
        "w_out_h": init(wk[6], (node_features, out_features)),
        "w_out_x": init(wk[7], (node_features, out_features)),
        "b_out":   init(wk[8], (1, out_features)),
    }

    out = aggregation_mpnn_forward(adj, nodes, edges, params,
                                   message_passes=message_passes,
                                   edge_storage_dtype=jnp.bfloat16)
    out = jax.block_until_ready(out)
    ref = reference_forward(adj, nodes, edges, params,
                            message_passes=message_passes,
                            edge_storage_dtype=jnp.bfloat16)

    assert out.shape == (B, out_features)
    assert bool(jnp.all(jnp.isfinite(out)))
    assert bool(jnp.allclose(out, ref, atol=1e-4, rtol=1e-4))
    print("KERNEL_OK")
</pallas_src>

<mosaic_0001>
module attributes {stable_mosaic.version = 11 : i64} {
  func.func @_mpnn_kernel(%arg0: i32, %arg1: memref<2x8x1xf32, #tpu.memory_space<vmem>>, %arg2: memref<2x8x16xf32, #tpu.memory_space<vmem>>, %arg3: memref<2x8x8x16xbf16, #tpu.memory_space<vmem>>, %arg4: memref<16x16xf32, #tpu.memory_space<vmem>>, %arg5: memref<16x16xf32, #tpu.memory_space<vmem>>, %arg6: memref<16x16xf32, #tpu.memory_space<vmem>>, %arg7: memref<1x16xf32, #tpu.memory_space<vmem>>, %arg8: memref<16x8xf32, #tpu.memory_space<vmem>>, %arg9: memref<16x8xf32, #tpu.memory_space<vmem>>, %arg10: memref<1x8xf32, #tpu.memory_space<vmem>>, %arg11: memref<2x8xf32, #tpu.memory_space<vmem>>, %arg12: memref<2x8x16xf32, #tpu.memory_space<vmem>>) attributes {dimension_semantics = [#tpu.dimension_semantics<parallel>], iteration_bounds = array<i64: 1>, scalar_prefetch = 0 : i64, scratch_operands = 1 : i64, tpu.core_type = #tpu.core_type<tc>, window_params = [{transform_indices = @transform_0, window_bounds = array<i64: 2, 8, 1>}, {transform_indices = @transform_1, window_bounds = array<i64: 2, 8, 16>}, {transform_indices = @transform_2, window_bounds = array<i64: 2, 8, 8, 16>}, {pipeline_mode = #tpu.pipeline_mode<synchronous>, transform_indices = @transform_3, window_bounds = array<i64: 16, 16>}, {pipeline_mode = #tpu.pipeline_mode<synchronous>, transform_indices = @transform_4, window_bounds = array<i64: 16, 16>}, {pipeline_mode = #tpu.pipeline_mode<synchronous>, transform_indices = @transform_5, window_bounds = array<i64: 16, 16>}, {pipeline_mode = #tpu.pipeline_mode<synchronous>, transform_indices = @transform_6, window_bounds = array<i64: 1, 16>}, {pipeline_mode = #tpu.pipeline_mode<synchronous>, transform_indices = @transform_7, window_bounds = array<i64: 16, 8>}, {pipeline_mode = #tpu.pipeline_mode<synchronous>, transform_indices = @transform_8, window_bounds = array<i64: 16, 8>}, {pipeline_mode = #tpu.pipeline_mode<synchronous>, transform_indices = @transform_9, window_bounds = array<i64: 1, 8>}, {transform_indices = @transform_10, window_bounds = array<i64: 2, 8>}]} {
    %c0 = arith.constant 0 : index
    %c0_0 = arith.constant 0 : index
    %c0_1 = arith.constant 0 : index
    %0 = vector.load %arg2[%c0, %c0_0, %c0_1] : memref<2x8x16xf32, #tpu.memory_space<vmem>>, vector<2x8x16xf32>
    %1 = vector.shape_cast %0 : vector<2x8x16xf32> to vector<16x16xf32>
    %c0_2 = arith.constant 0 : index
    %c0_3 = arith.constant 0 : index
    %c0_4 = arith.constant 0 : index
    %2 = vector.load %arg1[%c0_2, %c0_3, %c0_4] : memref<2x8x1xf32, #tpu.memory_space<vmem>>, vector<2x8x1xf32>
    %3 = vector.shape_cast %2 : vector<2x8x1xf32> to vector<16x1xf32>
    %c0_5 = arith.constant 0 : index
    %c0_6 = arith.constant 0 : index
    %4 = vector.load %arg4[%c0_5, %c0_6] : memref<16x16xf32, #tpu.memory_space<vmem>>, vector<16x16xf32>
    %c0_7 = arith.constant 0 : index
    %c0_8 = arith.constant 0 : index
    %5 = vector.load %arg5[%c0_7, %c0_8] : memref<16x16xf32, #tpu.memory_space<vmem>>, vector<16x16xf32>
    %c0_9 = arith.constant 0 : index
    %c0_10 = arith.constant 0 : index
    %6 = vector.load %arg6[%c0_9, %c0_10] : memref<16x16xf32, #tpu.memory_space<vmem>>, vector<16x16xf32>
    %c0_11 = arith.constant 0 : index
    %c0_12 = arith.constant 0 : index
    %7 = vector.load %arg7[%c0_11, %c0_12] : memref<1x16xf32, #tpu.memory_space<vmem>>, vector<1x16xf32>
    %c0_13 = arith.constant 0 : index
    %c0_14 = arith.constant 0 : index
    %8 = vector.load %arg8[%c0_13, %c0_14] : memref<16x8xf32, #tpu.memory_space<vmem>>, vector<16x8xf32>
    %c0_15 = arith.constant 0 : index
    %c0_16 = arith.constant 0 : index
    %9 = vector.load %arg9[%c0_15, %c0_16] : memref<16x8xf32, #tpu.memory_space<vmem>>, vector<16x8xf32>
    %c0_17 = arith.constant 0 : index
    %c0_18 = arith.constant 0 : index
    %10 = vector.load %arg10[%c0_17, %c0_18] : memref<1x8xf32, #tpu.memory_space<vmem>>, vector<1x8xf32>
    %cst = arith.constant dense<0.000000e+00> : vector<16x16xf32>
    %11 = tpu.matmul %1, %4, %cst {dimension_numbers = #tpu.dot_dimension_numbers<[1], [0], [0], [1], [0, 0, 1, 1], [], []>} : vector<16x16xf32>, vector<16x16xf32>, vector<16x16xf32> -> vector<16x16xf32>
    %12 = vector.shape_cast %11 : vector<16x16xf32> to vector<2x8x16xf32>
    %c0_19 = arith.constant 0 : index
    %c0_20 = arith.constant 0 : index
    %c0_21 = arith.constant 0 : index
    %13 = vector.load %arg12[%c0_19, %c0_20, %c0_21] : memref<2x8x16xf32, #tpu.memory_space<vmem>>, vector<2x8x16xf32>
    tpu.vector_store %arg12[%c0_19, %c0_20, %c0_21], %12 {strides = array<i32>} : memref<2x8x16xf32, #tpu.memory_space<vmem>>, vector<2x8x16xf32>,
    %cst_22 = arith.constant 0.000000e+00 : f32
    %14 = vector.broadcast %cst_22 : f32 to vector<2x8x16xf32>
    %c0_i32 = arith.constant 0 : i32
    %c8_i32 = arith.constant 8 : i32
    %15 = arith.muli %c0_i32, %c8_i32 : i32
    %16 = tpu.assume_multiple %15, 8 : i32
    %c0_23 = arith.constant 0 : index
    %c0_24 = arith.constant 0 : index
    %17 = arith.index_cast %16 : i32 to index
    %c0_25 = arith.constant 0 : index
    %18 = vector.load %arg3[%c0_23, %c0_24, %17, %c0_25] : memref<2x8x8x16xbf16, #tpu.memory_space<vmem>>, vector<2x8x8x16xbf16>
    %19 = arith.extf %18 : vector<2x8x8x16xbf16> to vector<2x8x8x16xf32>
    %c0_26 = arith.constant 0 : index
    %20 = arith.index_cast %16 : i32 to index
    %c0_27 = arith.constant 0 : index
    %21 = vector.load %arg12[%c0_26, %20, %c0_27] : memref<2x8x16xf32, #tpu.memory_space<vmem>>, vector<2x8x16xf32>
    %22 = vector.shape_cast %21 : vector<2x8x16xf32> to vector<2x1x8x16xf32>
    %23 = vector.broadcast %22 : vector<2x1x8x16xf32> to vector<2x8x8x16xf32>
    %24 = arith.addf %19, %23 : vector<2x8x8x16xf32>
    %cst_28 = arith.constant 0.000000e+00 : f32
    %25 = vector.broadcast %cst_28 : f32 to vector<2x8x8x16xf32>
    %26 = arith.maximumf %24, %25 : vector<2x8x8x16xf32>
    %cst_29 = arith.constant dense<0.000000e+00> : vector<2x8x16xf32>
    %27 = vector.multi_reduction <add>, %26, %cst_29 [2] : vector<2x8x8x16xf32> to vector<2x8x16xf32>
    %28 = arith.addf %14, %27 : vector<2x8x16xf32>
    %c1_i32 = arith.constant 1 : i32
    %cst_30 = arith.constant dense<0.000000e+00> : vector<16x16xf32>
    %29 = tpu.matmul %1, %5, %cst_30 {dimension_numbers = #tpu.dot_dimension_numbers<[1], [0], [0], [1], [0, 0, 1, 1], [], []>} : vector<16x16xf32>, vector<16x16xf32>, vector<16x16xf32> -> vector<16x16xf32>
    %30 = vector.shape_cast %28 : vector<2x8x16xf32> to vector<16x16xf32>
    %cst_31 = arith.constant dense<0.000000e+00> : vector<16x16xf32>
    %31 = tpu.matmul %30, %6, %cst_31 {dimension_numbers = #tpu.dot_dimension_numbers<[1], [0], [0], [1], [0, 0, 1, 1], [], []>} : vector<16x16xf32>, vector<16x16xf32>, vector<16x16xf32> -> vector<16x16xf32>
    %32 = arith.addf %29, %31 : vector<16x16xf32>
    %33 = vector.broadcast %7 : vector<1x16xf32> to vector<16x16xf32>
    %34 = arith.addf %32, %33 : vector<16x16xf32>
    %cst_32 = arith.constant 0.000000e+00 : f32
    %35 = vector.broadcast %cst_32 : f32 to vector<16x16xf32>
    %36 = arith.maximumf %34, %35 : vector<16x16xf32>
    %cst_33 = arith.constant 0.000000e+00 : f32
    %37 = vector.broadcast %cst_33 : f32 to vector<16x1xf32>
    %38 = arith.cmpf ogt, %3, %37 : vector<16x1xf32>
    %39 = vector.shape_cast %38 : vector<16x1xi1> to vector<16x1xi1>
    %40 = vector.broadcast %39 : vector<16x1xi1> to vector<16x16xi1>
    %41 = arith.select %40, %36, %1 : vector<16x16xi1>, vector<16x16xf32>
    %cst_34 = arith.constant dense<0.000000e+00> : vector<16x16xf32>
    %42 = tpu.matmul %41, %4, %cst_34 {dimension_numbers = #tpu.dot_dimension_numbers<[1], [0], [0], [1], [0, 0, 1, 1], [], []>} : vector<16x16xf32>, vector<16x16xf32>, vector<16x16xf32> -> vector<16x16xf32>
    %43 = vector.shape_cast %42 : vector<16x16xf32> to vector<2x8x16xf32>
    %c0_35 = arith.constant 0 : index
    %c0_36 = arith.constant 0 : index
    %c0_37 = arith.constant 0 : index
    %44 = vector.load %arg12[%c0_35, %c0_36, %c0_37] : memref<2x8x16xf32, #tpu.memory_space<vmem>>, vector<2x8x16xf32>
    tpu.vector_store %arg12[%c0_35, %c0_36, %c0_37], %43 {strides = array<i32>} : memref<2x8x16xf32, #tpu.memory_space<vmem>>, vector<2x8x16xf32>,
    %cst_38 = arith.constant 0.000000e+00 : f32
    %45 = vector.broadcast %cst_38 : f32 to vector<2x8x16xf32>
    %c0_i32_39 = arith.constant 0 : i32
    %c8_i32_40 = arith.constant 8 : i32
    %46 = arith.muli %c0_i32_39, %c8_i32_40 : i32
    %47 = tpu.assume_multiple %46, 8 : i32
    %c0_41 = arith.constant 0 : index
    %c0_42 = arith.constant 0 : index
    %48 = arith.index_cast %47 : i32 to index
    %c0_43 = arith.constant 0 : index
    %49 = vector.load %arg3[%c0_41, %c0_42, %48, %c0_43] : memref<2x8x8x16xbf16, #tpu.memory_space<vmem>>, vector<2x8x8x16xbf16>
    %50 = arith.extf %49 : vector<2x8x8x16xbf16> to vector<2x8x8x16xf32>
    %c0_44 = arith.constant 0 : index
    %51 = arith.index_cast %47 : i32 to index
    %c0_45 = arith.constant 0 : index
    %52 = vector.load %arg12[%c0_44, %51, %c0_45] : memref<2x8x16xf32, #tpu.memory_space<vmem>>, vector<2x8x16xf32>
    %53 = vector.shape_cast %52 : vector<2x8x16xf32> to vector<2x1x8x16xf32>
    %54 = vector.broadcast %53 : vector<2x1x8x16xf32> to vector<2x8x8x16xf32>
    %55 = arith.addf %50, %54 : vector<2x8x8x16xf32>
    %cst_46 = arith.constant 0.000000e+00 : f32
    %56 = vector.broadcast %cst_46 : f32 to vector<2x8x8x16xf32>
    %57 = arith.maximumf %55, %56 : vector<2x8x8x16xf32>
    %cst_47 = arith.constant dense<0.000000e+00> : vector<2x8x16xf32>
    %58 = vector.multi_reduction <add>, %57, %cst_47 [2] : vector<2x8x8x16xf32> to vector<2x8x16xf32>
    %59 = arith.addf %45, %58 : vector<2x8x16xf32>
    %c1_i32_48 = arith.constant 1 : i32
    %cst_49 = arith.constant dense<0.000000e+00> : vector<16x16xf32>
    %60 = tpu.matmul %41, %5, %cst_49 {dimension_numbers = #tpu.dot_dimension_numbers<[1], [0], [0], [1], [0, 0, 1, 1], [], []>} : vector<16x16xf32>, vector<16x16xf32>, vector<16x16xf32> -> vector<16x16xf32>
    %61 = vector.shape_cast %59 : vector<2x8x16xf32> to vector<16x16xf32>
    %cst_50 = arith.constant dense<0.000000e+00> : vector<16x16xf32>
    %62 = tpu.matmul %61, %6, %cst_50 {dimension_numbers = #tpu.dot_dimension_numbers<[1], [0], [0], [1], [0, 0, 1, 1], [], []>} : vector<16x16xf32>, vector<16x16xf32>, vector<16x16xf32> -> vector<16x16xf32>
    %63 = arith.addf %60, %62 : vector<16x16xf32>
    %64 = vector.broadcast %7 : vector<1x16xf32> to vector<16x16xf32>
    %65 = arith.addf %63, %64 : vector<16x16xf32>
    %cst_51 = arith.constant 0.000000e+00 : f32
    %66 = vector.broadcast %cst_51 : f32 to vector<16x16xf32>
    %67 = arith.maximumf %65, %66 : vector<16x16xf32>
    %cst_52 = arith.constant 0.000000e+00 : f32
    %68 = vector.broadcast %cst_52 : f32 to vector<16x1xf32>
    %69 = arith.cmpf ogt, %3, %68 : vector<16x1xf32>
    %70 = vector.shape_cast %69 : vector<16x1xi1> to vector<16x1xi1>
    %71 = vector.broadcast %70 : vector<16x1xi1> to vector<16x16xi1>
    %72 = arith.select %71, %67, %41 : vector<16x16xi1>, vector<16x16xf32>
    %cst_53 = arith.constant dense<0.000000e+00> : vector<16x16xf32>
    %73 = tpu.matmul %72, %4, %cst_53 {dimension_numbers = #tpu.dot_dimension_numbers<[1], [0], [0], [1], [0, 0, 1, 1], [], []>} : vector<16x16xf32>, vector<16x16xf32>, vector<16x16xf32> -> vector<16x16xf32>
    %74 = vector.shape_cast %73 : vector<16x16xf32> to vector<2x8x16xf32>
    %c0_54 = arith.constant 0 : index
    %c0_55 = arith.constant 0 : index
    %c0_56 = arith.constant 0 : index
    %75 = vector.load %arg12[%c0_54, %c0_55, %c0_56] : memref<2x8x16xf32, #tpu.memory_space<vmem>>, vector<2x8x16xf32>
    tpu.vector_store %arg12[%c0_54, %c0_55, %c0_56], %74 {strides = array<i32>} : memref<2x8x16xf32, #tpu.memory_space<vmem>>, vector<2x8x16xf32>,
    %cst_57 = arith.constant 0.000000e+00 : f32
    %76 = vector.broadcast %cst_57 : f32 to vector<2x8x16xf32>
    %c0_i32_58 = arith.constant 0 : i32
    %c8_i32_59 = arith.constant 8 : i32
    %77 = arith.muli %c0_i32_58, %c8_i32_59 : i32
    %78 = tpu.assume_multiple %77, 8 : i32
    %c0_60 = arith.constant 0 : index
    %c0_61 = arith.constant 0 : index
    %79 = arith.index_cast %78 : i32 to index
    %c0_62 = arith.constant 0 : index
    %80 = vector.load %arg3[%c0_60, %c0_61, %79, %c0_62] : memref<2x8x8x16xbf16, #tpu.memory_space<vmem>>, vector<2x8x8x16xbf16>
    %81 = arith.extf %80 : vector<2x8x8x16xbf16> to vector<2x8x8x16xf32>
    %c0_63 = arith.constant 0 : index
    %82 = arith.index_cast %78 : i32 to index
    %c0_64 = arith.constant 0 : index
    %83 = vector.load %arg12[%c0_63, %82, %c0_64] : memref<2x8x16xf32, #tpu.memory_space<vmem>>, vector<2x8x16xf32>
    %84 = vector.shape_cast %83 : vector<2x8x16xf32> to vector<2x1x8x16xf32>
    %85 = vector.broadcast %84 : vector<2x1x8x16xf32> to vector<2x8x8x16xf32>
    %86 = arith.addf %81, %85 : vector<2x8x8x16xf32>
    %cst_65 = arith.constant 0.000000e+00 : f32
    %87 = vector.broadcast %cst_65 : f32 to vector<2x8x8x16xf32>
    %88 = arith.maximumf %86, %87 : vector<2x8x8x16xf32>
    %cst_66 = arith.constant dense<0.000000e+00> : vector<2x8x16xf32>
    %89 = vector.multi_reduction <add>, %88, %cst_66 [2] : vector<2x8x8x16xf32> to vector<2x8x16xf32>
    %90 = arith.addf %76, %89 : vector<2x8x16xf32>
    %c1_i32_67 = arith.constant 1 : i32
    %cst_68 = arith.constant dense<0.000000e+00> : vector<16x16xf32>
    %91 = tpu.matmul %72, %5, %cst_68 {dimension_numbers = #tpu.dot_dimension_numbers<[1], [0], [0], [1], [0, 0, 1, 1], [], []>} : vector<16x16xf32>, vector<16x16xf32>, vector<16x16xf32> -> vector<16x16xf32>
    %92 = vector.shape_cast %90 : vector<2x8x16xf32> to vector<16x16xf32>
    %cst_69 = arith.constant dense<0.000000e+00> : vector<16x16xf32>
    %93 = tpu.matmul %92, %6, %cst_69 {dimension_numbers = #tpu.dot_dimension_numbers<[1], [0], [0], [1], [0, 0, 1, 1], [], []>} : vector<16x16xf32>, vector<16x16xf32>, vector<16x16xf32> -> vector<16x16xf32>
    %94 = arith.addf %91, %93 : vector<16x16xf32>
    %95 = vector.broadcast %7 : vector<1x16xf32> to vector<16x16xf32>
    %96 = arith.addf %94, %95 : vector<16x16xf32>
    %cst_70 = arith.constant 0.000000e+00 : f32
    %97 = vector.broadcast %cst_70 : f32 to vector<16x16xf32>
    %98 = arith.maximumf %96, %97 : vector<16x16xf32>
    %cst_71 = arith.constant 0.000000e+00 : f32
    %99 = vector.broadcast %cst_71 : f32 to vector<16x1xf32>
    %100 = arith.cmpf ogt, %3, %99 : vector<16x1xf32>
    %101 = vector.shape_cast %100 : vector<16x1xi1> to vector<16x1xi1>
    %102 = vector.broadcast %101 : vector<16x1xi1> to vector<16x16xi1>
    %103 = arith.select %102, %98, %72 : vector<16x16xi1>, vector<16x16xf32>
    %cst_72 = arith.constant dense<0.000000e+00> : vector<16x8xf32>
    %104 = tpu.matmul %103, %8, %cst_72 {dimension_numbers = #tpu.dot_dimension_numbers<[1], [0], [0], [1], [0, 0, 1, 1], [], []>} : vector<16x16xf32>, vector<16x8xf32>, vector<16x8xf32> -> vector<16x8xf32>
    %cst_73 = arith.constant dense<0.000000e+00> : vector<16x8xf32>
    %105 = tpu.matmul %1, %9, %cst_73 {dimension_numbers = #tpu.dot_dimension_numbers<[1], [0], [0], [1], [0, 0, 1, 1], [], []>} : vector<16x16xf32>, vector<16x8xf32>, vector<16x8xf32> -> vector<16x8xf32>
    %106 = arith.addf %104, %105 : vector<16x8xf32>
    %107 = vector.broadcast %10 : vector<1x8xf32> to vector<16x8xf32>
    %108 = arith.addf %106, %107 : vector<16x8xf32>
    %cst_74 = arith.constant 0.000000e+00 : f32
    %109 = vector.broadcast %cst_74 : f32 to vector<16x8xf32>
    %110 = arith.maximumf %108, %109 : vector<16x8xf32>
    %cst_75 = arith.constant 0.000000e+00 : f32
    %111 = vector.broadcast %cst_75 : f32 to vector<16x1xf32>
    %112 = arith.cmpf ogt, %3, %111 : vector<16x1xf32>
    %cst_76 = arith.constant 0.000000e+00 : f32
    %113 = vector.shape_cast %112 : vector<16x1xi1> to vector<16x1xi1>
    %114 = vector.broadcast %113 : vector<16x1xi1> to vector<16x8xi1>
    %115 = vector.broadcast %cst_76 : f32 to vector<16x8xf32>
    %116 = arith.select %114, %110, %115 : vector<16x8xi1>, vector<16x8xf32>
    %117 = vector.shape_cast %116 : vector<16x8xf32> to vector<2x8x8xf32>
    %cst_77 = arith.constant dense<0.000000e+00> : vector<2x8xf32>
    %118 = vector.multi_reduction <add>, %117, %cst_77 [1] : vector<2x8x8xf32> to vector<2x8xf32>
    %c0_78 = arith.constant 0 : index
    %c0_79 = arith.constant 0 : index
    %119 = vector.load %arg11[%c0_78, %c0_79] : memref<2x8xf32, #tpu.memory_space<vmem>>, vector<2x8xf32>
    tpu.vector_store %arg11[%c0_78, %c0_79], %118 {strides = array<i32>} : memref<2x8xf32, #tpu.memory_space<vmem>>, vector<2x8xf32>,
    return
  }
  func.func @transform_0(%arg0: i32) -> (i32, i32, i32) {
    %c0_i32 = arith.constant 0 : i32
    %c0_i32_0 = arith.constant 0 : i32
    %c0_i32_1 = arith.constant 0 : i32
    return %arg0, %c0_i32, %c0_i32_0 : i32, i32, i32
  }
  func.func @transform_1(%arg0: i32) -> (i32, i32, i32) {
    %c0_i32 = arith.constant 0 : i32
    %c0_i32_0 = arith.constant 0 : i32
    %c0_i32_1 = arith.constant 0 : i32
    return %arg0, %c0_i32, %c0_i32_0 : i32, i32, i32
  }
  func.func @transform_2(%arg0: i32) -> (i32, i32, i32, i32) {
    %c0_i32 = arith.constant 0 : i32
    %c0_i32_0 = arith.constant 0 : i32
    %c0_i32_1 = arith.constant 0 : i32
    %c0_i32_2 = arith.constant 0 : i32
    return %arg0, %c0_i32, %c0_i32_0, %c0_i32_1 : i32, i32, i32, i32
  }
  func.func @transform_3(%arg0: i32) -> (i32, i32) {
    %c0_i32 = arith.constant 0 : i32
    %c0_i32_0 = arith.constant 0 : i32
    %c0_i32_1 = arith.constant 0 : i32
    return %c0_i32, %c0_i32_0 : i32, i32
  }
  func.func @transform_4(%arg0: i32) -> (i32, i32) {
    %c0_i32 = arith.constant 0 : i32
    %c0_i32_0 = arith.constant 0 : i32
    %c0_i32_1 = arith.constant 0 : i32
    return %c0_i32, %c0_i32_0 : i32, i32
  }
  func.func @transform_5(%arg0: i32) -> (i32, i32) {
    %c0_i32 = arith.constant 0 : i32
    %c0_i32_0 = arith.constant 0 : i32
    %c0_i32_1 = arith.constant 0 : i32
    return %c0_i32, %c0_i32_0 : i32, i32
  }
  func.func @transform_6(%arg0: i32) -> (i32, i32) {
    %c0_i32 = arith.constant 0 : i32
    %c0_i32_0 = arith.constant 0 : i32
    %c0_i32_1 = arith.constant 0 : i32
    return %c0_i32, %c0_i32_0 : i32, i32
  }
  func.func @transform_7(%arg0: i32) -> (i32, i32) {
    %c0_i32 = arith.constant 0 : i32
    %c0_i32_0 = arith.constant 0 : i32
    %c0_i32_1 = arith.constant 0 : i32
    return %c0_i32, %c0_i32_0 : i32, i32
  }
  func.func @transform_8(%arg0: i32) -> (i32, i32) {
    %c0_i32 = arith.constant 0 : i32
    %c0_i32_0 = arith.constant 0 : i32
    %c0_i32_1 = arith.constant 0 : i32
    return %c0_i32, %c0_i32_0 : i32, i32
  }
  func.func @transform_9(%arg0: i32) -> (i32, i32) {
    %c0_i32 = arith.constant 0 : i32
    %c0_i32_0 = arith.constant 0 : i32
    %c0_i32_1 = arith.constant 0 : i32
    return %c0_i32, %c0_i32_0 : i32, i32
  }
  func.func @transform_10(%arg0: i32) -> (i32, i32) {
    %c0_i32 = arith.constant 0 : i32
    %c0_i32_0 = arith.constant 0 : i32
    return %arg0, %c0_i32 : i32, i32
  }
}

</mosaic_0001>

<llo_original>
// kernel: tpu_custom_call.1
$region0: #{tpu_custom_call.1}
  #allocation0 [shape = 'u32[]', space=smem, size = 0x4, offset = 0x4, fixed_abs, tag = 'smem constant byte address 0x4 - core index']
  #allocation1 [shape = 'u32[144,128]{1,0:T(1,128)}', space=vmem, size = 0x12000, scoped, tag = 'internal scratch']
  #allocation2 [shape = 'f32[2,8,16]{2,1,0:T(8,128)}', space=vmem, size = 0x2000, scoped, tag = 'scratch operand']
  %s0 = inlined_call_operand.vmem [shape: f32[2,8,1], index: 0, kind: input, shape index: {}]
  %s1 = inlined_call_operand.hbm [shape: f32[2,8,16], index: 1, kind: input, shape index: {}]
  %s2 = inlined_call_operand.vmem [shape: bf16[2,8,8,16], index: 2, kind: input, shape index: {}]
  %s3 = inlined_call_operand.hbm [shape: f32[16,16], index: 3, kind: input, shape index: {}]
  %s4 = inlined_call_operand.vmem [shape: f32[16,16], index: 4, kind: input, shape index: {}]
  %s5 = inlined_call_operand.hbm [shape: f32[16,16], index: 5, kind: input, shape index: {}]
  %s6 = inlined_call_operand.hbm [shape: f32[1,16], index: 6, kind: input, shape index: {}]
  %s7 = inlined_call_operand.vmem [shape: f32[16,8], index: 7, kind: input, shape index: {}]
  %s8 = inlined_call_operand.vmem [shape: f32[16,8], index: 8, kind: input, shape index: {}]
  %s9 = inlined_call_operand.vmem [shape: f32[1,8], index: 9, kind: input, shape index: {}]
  %s10 = inlined_call_operand.hbm [shape: f32[2,8], index: 10, kind: output, shape index: {}]
  %s11 = sld [smem:[#allocation0]]
  $region66: #{tpu_custom_call.1} parent=0
    _
  %s13 = ssub.s32 1, %s11
  %s14 = scalar_select 0, %s13, %s11
  $region1: #{tpu_custom_call.1} parent=0
    #allocation3 [shape = 'u8[8192]{0}', space=vmem, size = 0x2000, scoped, tag = 'input window, operand 1, single buffered']
    #allocation4 [shape = 's32[1]{0}', space=sflag, size = 0x4, scoped, tag = 'scoped memory for tpu_custom_call.1']
    #allocation5 [shape = 's32[1]{0}', space=sflag, size = 0x4, scoped, tag = 'scoped memory for tpu_custom_call.1']
    #allocation6 [shape = 'u8[8192]{0}', space=vmem, size = 0x2000, scoped, tag = 'input window, operand 3, single buffered']
    #allocation7 [shape = 's32[1]{0}', space=sflag, size = 0x4, scoped, tag = 'scoped memory for tpu_custom_call.1']
    #allocation8 [shape = 'u8[8192]{0}', space=vmem, size = 0x2000, scoped, tag = 'input window, operand 5, single buffered']
    #allocation9 [shape = 'u8[512]{0}', space=vmem, size = 0x400, scoped, tag = 'input window, operand 6, single buffered']
    #allocation10 [shape = 's32[1]{0}', space=sflag, size = 0x4, scoped, tag = 'scoped memory for tpu_custom_call.1']
    #allocation11 [shape = 'u8[1024]{0}', space=vmem, size = 0x400, scoped, tag = 'output window, operand 0, single buffered']
    %15 = vsyncpa [#allocation4], 0
    %16 = vsyncpa [#allocation7], 0
    %17 = vsyncpa [#allocation10], 0
    %18 = vsyncpa [#allocation5], 0
    // Predicated region
    $region2: #{tpu_custom_call.1} parent=1 // pred_check
      _
    $region3: #{tpu_custom_call.1} parent=1 // pred_check_branch
      %20 = sbr.rel (0) target = $region5
    $region4: #{tpu_custom_call.1} parent=1 // pred_region
      _
    $region5: #{tpu_custom_call.1} parent=1 // pred_fallthru
      _
    // Predicated region
    $region6: #{tpu_custom_call.1} parent=1 // pred_check
      _
    $region7: #{tpu_custom_call.1} parent=1 // pred_check_branch
      %22 = sbr.rel (0) target = $region9
    $region8: #{tpu_custom_call.1} parent=1 // pred_region
      %s24 = ssub.s32 256, 256
      %25 = vsyncadd [#allocation4], %s24
      %s26 = sshll.u32 [#allocation3], 4
      %s27 = int_to_ptr.vmem [resolvable:$true] %s26
      %32 = dma.hbm_to_vmem [thread:$0]  %s1, 256, %s27, [#allocation4], 128, 128, 8
    $region9: #{tpu_custom_call.1} parent=1 // pred_fallthru
      _
    // Predicated region
    $region10: #{tpu_custom_call.1} parent=1 // pred_check
      _
    $region11: #{tpu_custom_call.1} parent=1 // pred_check_branch
      %34 = sbr.rel (0) target = $region13
    $region12: #{tpu_custom_call.1} parent=1 // pred_region
      _
    $region13: #{tpu_custom_call.1} parent=1 // pred_fallthru
      _
    // Predicated region
    $region14: #{tpu_custom_call.1} parent=1 // pred_check
      _
    $region15: #{tpu_custom_call.1} parent=1 // pred_check_branch
      %36 = sbr.rel (0) target = $region17
    $region16: #{tpu_custom_call.1} parent=1 // pred_region
      %s38 = ssub.s32 256, 256
      %39 = vsyncadd [#allocation7], %s38
      %s40 = sshll.u32 [#allocation6], 4
      %s41 = int_to_ptr.vmem [resolvable:$true] %s40
      %46 = dma.hbm_to_vmem [thread:$0]  %s3, 256, %s41, [#allocation7], 128, 128, 8
    $region17: #{tpu_custom_call.1} parent=1 // pred_fallthru
      _
    // Predicated region
    $region18: #{tpu_custom_call.1} parent=1 // pred_check
      _
    $region19: #{tpu_custom_call.1} parent=1 // pred_check_branch
      %48 = sbr.rel (0) target = $region21
    $region20: #{tpu_custom_call.1} parent=1 // pred_region
      _
    $region21: #{tpu_custom_call.1} parent=1 // pred_fallthru
      _
    // Predicated region
    $region22: #{tpu_custom_call.1} parent=1 // pred_check
      _
    $region23: #{tpu_custom_call.1} parent=1 // pred_check_branch
      %50 = sbr.rel (0) target = $region25
    $region24: #{tpu_custom_call.1} parent=1 // pred_region
      %s52 = ssub.s32 256, 256
      %53 = vsyncadd [#allocation7], %s52
      %s54 = sshll.u32 [#allocation8], 4
      %s55 = int_to_ptr.vmem [resolvable:$true] %s54
      %60 = dma.hbm_to_vmem [thread:$0]  %s5, 256, %s55, [#allocation7], 128, 128, 8
    $region25: #{tpu_custom_call.1} parent=1 // pred_fallthru
      _
    // Predicated region
    $region26: #{tpu_custom_call.1} parent=1 // pred_check
      _
    $region27: #{tpu_custom_call.1} parent=1 // pred_check_branch
      %62 = sbr.rel (0) target = $region29
    $region28: #{tpu_custom_call.1} parent=1 // pred_region
      %s64 = ssub.s32 16, 16
      %65 = vsyncadd [#allocation10], %s64
      %s67 = sshll.u32 [#allocation9], 4
      %s68 = int_to_ptr.vmem [resolvable:$true] %s67
      %70 = dma.hbm_to_vmem [thread:$0]  %s6, 16, %s68, [#allocation10]
    $region29: #{tpu_custom_call.1} parent=1 // pred_fallthru
      _
    // Predicated region
    $region30: #{tpu_custom_call.1} parent=1 // pred_check
      _
    $region31: #{tpu_custom_call.1} parent=1 // pred_check_branch
      %72 = sbr.rel (0) target = $region33
    $region32: #{tpu_custom_call.1} parent=1 // pred_region
      _
    $region33: #{tpu_custom_call.1} parent=1 // pred_fallthru
      _
    // Predicated region
    $region34: #{tpu_custom_call.1} parent=1 // pred_check
      _
    $region35: #{tpu_custom_call.1} parent=1 // pred_check_branch
      %74 = sbr.rel (0) target = $region37
    $region36: #{tpu_custom_call.1} parent=1 // pred_region
      _
    $region37: #{tpu_custom_call.1} parent=1 // pred_fallthru
      _
    // Predicated region
    $region38: #{tpu_custom_call.1} parent=1 // pred_check
      _
    $region39: #{tpu_custom_call.1} parent=1 // pred_check_branch
      %76 = sbr.rel (0) target = $region41
    $region40: #{tpu_custom_call.1} parent=1 // pred_region
      _
    $region41: #{tpu_custom_call.1} parent=1 // pred_fallthru
      _
    // Predicated region
    $region42: #{tpu_custom_call.1} parent=1 // pred_check
      _
    $region43: #{tpu_custom_call.1} parent=1 // pred_check_branch
      %78 = sbr.rel (0) target = $region45
    $region44: #{tpu_custom_call.1} parent=1 // pred_region
      %79 = dma.done [#allocation4], 256
    $region45: #{tpu_custom_call.1} parent=1 // pred_fallthru
      _
    // Predicated region
    $region46: #{tpu_custom_call.1} parent=1 // pred_check
      _
    $region47: #{tpu_custom_call.1} parent=1 // pred_check_branch
      %81 = sbr.rel (0) target = $region49
    $region48: #{tpu_custom_call.1} parent=1 // pred_region
      %82 = dma.done [#allocation7], 256
    $region49: #{tpu_custom_call.1} parent=1 // pred_fallthru
      _
    // Predicated region
    $region50: #{tpu_custom_call.1} parent=1 // pred_check
      _
    $region51: #{tpu_custom_call.1} parent=1 // pred_check_branch
      %84 = sbr.rel (0) target = $region53
    $region52: #{tpu_custom_call.1} parent=1 // pred_region
      %85 = dma.done [#allocation7], 256
    $region53: #{tpu_custom_call.1} parent=1 // pred_fallthru
      _
    // Predicated region
    $region54: #{tpu_custom_call.1} parent=1 // pred_check
      _
    $region55: #{tpu_custom_call.1} parent=1 // pred_check_branch
      %87 = sbr.rel (0) target = $region57
    $region56: #{tpu_custom_call.1} parent=1 // pred_region
      %88 = dma.done [#allocation10], 16
    $region57: #{tpu_custom_call.1} parent=1 // pred_fallthru
      _
    %v89 = vld [vmem:[#allocation3] sm:$0xff]
    %v90 = vld [vmem:[#allocation3 + $0x8] sm:$0xff]
    %v91 = vld [vmem:[%s0] sm:$0xff]
    %v92 = vld [vmem:[%s0 + $0x8] sm:$0xff]
    %v93 = vld [vmem:[#allocation6] sm:$0xff]
    %v94 = vld [vmem:[#allocation6 + $0x8] sm:$0xff]
    %v95 = vld [vmem:[%s4] sm:$0xff]
    %v96 = vld [vmem:[%s4 + $0x8] sm:$0xff]
    %v97 = vld [vmem:[#allocation8] sm:$0xff]
    %v98 = vld [vmem:[#allocation8 + $0x8] sm:$0xff]
    %v99 = vld [vmem:[#allocation9] sm:$0x1]
    %v100 = vld [vmem:[%s7] sm:$0xff]
    %v101 = vld [vmem:[%s7 + $0x8] sm:$0xff]
    %v102 = vld [vmem:[%s8] sm:$0xff]
    %v103 = vld [vmem:[%s8 + $0x8] sm:$0xff]
    %v104 = vld [vmem:[%s9] sm:$0x1]
    %vm105 = vcmask 130048
    %v107 = vsel %vm105, %v89, 0
    %v110 = vsel %vm105, %v90, 0
    %112 = vmatprep.subr.mxu0 0.0
    %113 = vmatpush1.msra.mxu0 %v93
    %114 = vmatprep.subr.mxu0 0.0
    %115 = vmatpush1.msra.mxu0 %v94
    %116 = vmatprep.subr.mxu0 0.0
    %117 = vmatpush1.msra.mxu0 0.0
    %118 = vmatprep.subr.mxu0 0.0
    %119 = vmatpush1.msra.mxu0 0.0
    %120 = vmatprep.subr.mxu0 0.0
    %121 = vmatpush1.msra.mxu0 0.0
    %122 = vmatprep.subr.mxu0 0.0
    %123 = vmatpush1.msra.mxu0 0.0
    %124 = vmatprep.subr.mxu0 0.0
    %125 = vmatpush1.msra.mxu0 0.0
    %126 = vmatprep.subr.mxu0 0.0
    %127 = vmatpush1.msra.mxu0 0.0
    %128 = vmatprep.subr.mxu0 0.0
    %129 = vmatpush1.msra.mxu0 0.0
    %130 = vmatprep.subr.mxu0 0.0
    %131 = vmatpush1.msra.mxu0 0.0
    %132 = vmatprep.subr.mxu0 0.0
    %133 = vmatpush1.msra.mxu0 0.0
    %134 = vmatprep.subr.mxu0 0.0
    %135 = vmatpush1.msra.mxu0 0.0
    %136 = vmatprep.subr.mxu0 0.0
    %137 = vmatpush1.msra.mxu0 0.0
    %138 = vmatprep.subr.mxu0 0.0
    %139 = vmatpush1.msra.mxu0 0.0
    %140 = vmatprep.subr.mxu0 0.0
    %141 = vmatpush1.msra.mxu0 0.0
    %142 = vmatprep.subr.mxu0 0.0
    %143 = vmatpush1.msra.mxu0 0.0
    %144 = vmatprep.subr.mxu0 0.0
    %145 = vmatpush1.msra.mxu0 0.0
    %146 = vmatprep.subr.mxu0 0.0
    %147 = vmatpush1.msra.mxu0 0.0
    %148 = vmatprep.subr.mxu0 0.0
    %149 = vmatpush1.msra.mxu0 0.0
    %150 = vmatprep.subr.mxu0 0.0
    %151 = vmatpush1.msra.mxu0 0.0
    %152 = vmatprep.subr.mxu0 0.0
    %153 = vmatpush1.msra.mxu0 0.0
    %154 = vmatprep.subr.mxu0 0.0
    %155 = vmatpush1.msra.mxu0 0.0
    %156 = vmatprep.subr.mxu0 0.0
    %157 = vmatpush1.msra.mxu0 0.0
    %158 = vmatprep.subr.mxu0 0.0
    %159 = vmatpush1.msra.mxu0 0.0
    %160 = vmatprep.subr.mxu0 0.0
    %161 = vmatpush1.msra.mxu0 0.0
    %162 = vmatprep.subr.mxu0 0.0
    %163 = vmatpush1.msra.mxu0 0.0
    %164 = vmatprep.subr.mxu0 0.0
    %165 = vmatpush1.msra.mxu0 0.0
    %166 = vmatprep.subr.mxu0 0.0
    %167 = vmatpush1.msra.mxu0 0.0
    %168 = vmatprep.subr.mxu0 0.0
    %169 = vmatpush1.msra.mxu0 0.0
    %170 = vmatprep.subr.mxu0 0.0
    %171 = vmatpush1.msra.mxu0 0.0
    %172 = vmatprep.subr.mxu0 0.0
    %173 = vmatpush1.msra.mxu0 0.0
    %174 = vmatprep.subr.mxu0 0.0
    %175 = vmatpush1.msra.mxu0 0.0
    %176 = vmatprep.mubr.f32.mxu0 0.0
    %177 = vmatmul.mubr.f32.gmra.mrb[0].mxu0 %v107
    %v178 = vpop.f32.mrb[0].mxu0
    %v179 = vadd.f32 0.0, %v178
    %v180 = vpop.f32.mrb[0].mxu0
    %181 = vmatprep.mubr.f32.mxu0 0.0
    %182 = vmatmul.mubr.f32.gmra.mrb[0].mxu0 %v110
    %v183 = vpop.f32.mrb[0].mxu0
    %v184 = vadd.f32 0.0, %v183
    %v185 = vpop.f32.mrb[0].mxu0
    %186 = vdwg.mxu0
    %187 = vst.msk [vmem:[#allocation2] sm:$0xff] %vm105, %v179
    %188 = vst.msk [vmem:[#allocation2 + $0x8] sm:$0xff] %vm105, %v184
    %v189 = vld [vmem:[%s2] sm:$0xf]
    %v190 = vld [vmem:[%s2 + $0x4] sm:$0xf]
    %v191 = vld [vmem:[%s2 + $0x8] sm:$0xf]
    %v192 = vld [vmem:[%s2 + $0xc] sm:$0xf]
    %v193 = vld [vmem:[%s2 + $0x10] sm:$0xf]
    %v194 = vld [vmem:[%s2 + $0x14] sm:$0xf]
    %v195 = vld [vmem:[%s2 + $0x18] sm:$0xf]
    %v196 = vld [vmem:[%s2 + $0x1c] sm:$0xf]
    %v197 = vld [vmem:[%s2 + $0x20] sm:$0xf]
    %v198 = vld [vmem:[%s2 + $0x24] sm:$0xf]
    %v199 = vld [vmem:[%s2 + $0x28] sm:$0xf]
    %v200 = vld [vmem:[%s2 + $0x2c] sm:$0xf]
    %v201 = vld [vmem:[%s2 + $0x30] sm:$0xf]
    %v202 = vld [vmem:[%s2 + $0x34] sm:$0xf]
    %v203 = vld [vmem:[%s2 + $0x38] sm:$0xf]
    %v204 = vld [vmem:[%s2 + $0x3c] sm:$0xf]
    %v205 = vunpack.c.l.bf16 %v189
    %v206 = vunpack.c.l.bf16 %v190
    %v207 = vunpack.c.l.bf16 %v191
    %v208 = vunpack.c.l.bf16 %v192
    %v209 = vunpack.c.l.bf16 %v193
    %v210 = vunpack.c.l.bf16 %v194
    %v211 = vunpack.c.l.bf16 %v195
    %v212 = vunpack.c.l.bf16 %v196
    %v213 = vunpack.c.l.bf16 %v197
    %v214 = vunpack.c.l.bf16 %v198
    %v215 = vunpack.c.l.bf16 %v199
    %v216 = vunpack.c.l.bf16 %v200
    %v217 = vunpack.c.l.bf16 %v201
    %v218 = vunpack.c.l.bf16 %v202
    %v219 = vunpack.c.l.bf16 %v203
    %v220 = vunpack.c.l.bf16 %v204
    %v221 = vld [vmem:[#allocation2] sm:$0xff]
    %v222 = vld [vmem:[#allocation2 + $0x8] sm:$0xff]
    %v223 = vadd.f32 %v205, %v221
    %v224 = vadd.f32 %v206, %v221
    %v225 = vadd.f32 %v207, %v221
    %v226 = vadd.f32 %v208, %v221
    %v227 = vadd.f32 %v209, %v221
    %v228 = vadd.f32 %v210, %v221
    %v229 = vadd.f32 %v211, %v221
    %v230 = vadd.f32 %v212, %v221
    %v231 = vadd.f32 %v213, %v222
    %v232 = vadd.f32 %v214, %v222
    %v233 = vadd.f32 %v215, %v222
    %v234 = vadd.f32 %v216, %v222
    %v235 = vadd.f32 %v217, %v222
    %v236 = vadd.f32 %v218, %v222
    %v237 = vadd.f32 %v219, %v222
    %v238 = vadd.f32 %v220, %v222
    %v239 = vmax.f32 %v223, 0.0
    %v240 = vmax.f32 %v224, 0.0
    %v241 = vmax.f32 %v225, 0.0
    %v242 = vmax.f32 %v226, 0.0
    %v243 = vmax.f32 %v227, 0.0
    %v244 = vmax.f32 %v228, 0.0
    %v245 = vmax.f32 %v229, 0.0
    %v246 = vmax.f32 %v230, 0.0
    %v247 = vmax.f32 %v231, 0.0
    %v248 = vmax.f32 %v232, 0.0
    %v249 = vmax.f32 %v233, 0.0
    %v250 = vmax.f32 %v234, 0.0
    %v251 = vmax.f32 %v235, 0.0
    %v252 = vmax.f32 %v236, 0.0
    %v253 = vmax.f32 %v237, 0.0
    %v254 = vmax.f32 %v238, 0.0
    %v255 = vsel %vm105, %v239, 0.0
    %v256 = vrot.slane %v255, 4
    %v257 = vadd.f32 %v255, %v256
    %v258 = vrot.slane %v257, 2
    %v259 = vadd.f32 %v257, %v258
    %v260 = vrot.slane %v259, 1
    %v261 = vadd.f32 %v259, %v260
    %v262 = vsel %vm105, %v240, 0.0
    %v263 = vrot.slane %v262, 4
    %v264 = vadd.f32 %v262, %v263
    %v265 = vrot.slane %v264, 2
    %v266 = vadd.f32 %v264, %v265
    %v267 = vrot.slane %v266, 1
    %v268 = vadd.f32 %v266, %v267
    %v269 = vsel %vm105, %v241, 0.0
    %v270 = vrot.slane %v269, 4
    %v271 = vadd.f32 %v269, %v270
    %v272 = vrot.slane %v271, 2
    %v273 = vadd.f32 %v271, %v272
    %v274 = vrot.slane %v273, 1
    %v275 = vadd.f32 %v273, %v274
    %v276 = vsel %vm105, %v242, 0.0
    %v277 = vrot.slane %v276, 4
    %v278 = vadd.f32 %v276, %v277
    %v279 = vrot.slane %v278, 2
    %v280 = vadd.f32 %v278, %v279
    %v281 = vrot.slane %v280, 1
    %v282 = vadd.f32 %v280, %v281
    %v283 = vsel %vm105, %v243, 0.0
    %v284 = vrot.slane %v283, 4
    %v285 = vadd.f32 %v283, %v284
    %v286 = vrot.slane %v285, 2
    %v287 = vadd.f32 %v285, %v286
    %v288 = vrot.slane %v287, 1
    %v289 = vadd.f32 %v287, %v288
    %v290 = vsel %vm105, %v244, 0.0
    %v291 = vrot.slane %v290, 4
    %v292 = vadd.f32 %v290, %v291
    %v293 = vrot.slane %v292, 2
    %v294 = vadd.f32 %v292, %v293
    %v295 = vrot.slane %v294, 1
    %v296 = vadd.f32 %v294, %v295
    %v297 = vsel %vm105, %v245, 0.0
    %v298 = vrot.slane %v297, 4
    %v299 = vadd.f32 %v297, %v298
    %v300 = vrot.slane %v299, 2
    %v301 = vadd.f32 %v299, %v300
    %v302 = vrot.slane %v301, 1
    %v303 = vadd.f32 %v301, %v302
    %v304 = vsel %vm105, %v246, 0.0
    %v305 = vrot.slane %v304, 4
    %v306 = vadd.f32 %v304, %v305
    %v307 = vrot.slane %v306, 2
    %v308 = vadd.f32 %v306, %v307
    %v309 = vrot.slane %v308, 1
    %v310 = vadd.f32 %v308, %v309
    %v311 = vsel %vm105, %v247, 0.0
    %v312 = vrot.slane %v311, 4
    %v313 = vadd.f32 %v311, %v312
    %v314 = vrot.slane %v313, 2
    %v315 = vadd.f32 %v313, %v314
    %v316 = vrot.slane %v315, 1
    %v317 = vadd.f32 %v315, %v316
    %v318 = vsel %vm105, %v248, 0.0
    %v319 = vrot.slane %v318, 4
    %v320 = vadd.f32 %v318, %v319
    %v321 = vrot.slane %v320, 2
    %v322 = vadd.f32 %v320, %v321
    %v323 = vrot.slane %v322, 1
    %v324 = vadd.f32 %v322, %v323
    %v325 = vsel %vm105, %v249, 0.0
    %v326 = vrot.slane %v325, 4
    %v327 = vadd.f32 %v325, %v326
    %v328 = vrot.slane %v327, 2
    %v329 = vadd.f32 %v327, %v328
    %v330 = vrot.slane %v329, 1
    %v331 = vadd.f32 %v329, %v330
    %v332 = vsel %vm105, %v250, 0.0
    %v333 = vrot.slane %v332, 4
    %v334 = vadd.f32 %v332, %v333
    %v335 = vrot.slane %v334, 2
    %v336 = vadd.f32 %v334, %v335
    %v337 = vrot.slane %v336, 1
    %v338 = vadd.f32 %v336, %v337
    %v339 = vsel %vm105, %v251, 0.0
    %v340 = vrot.slane %v339, 4
    %v341 = vadd.f32 %v339, %v340
    %v342 = vrot.slane %v341, 2
    %v343 = vadd.f32 %v341, %v342
    %v344 = vrot.slane %v343, 1
    %v345 = vadd.f32 %v343, %v344
    %v346 = vsel %vm105, %v252, 0.0
    %v347 = vrot.slane %v346, 4
    %v348 = vadd.f32 %v346, %v347
    %v349 = vrot.slane %v348, 2
    %v350 = vadd.f32 %v348, %v349
    %v351 = vrot.slane %v350, 1
    %v352 = vadd.f32 %v350, %v351
    %v353 = vsel %vm105, %v253, 0.0
    %v354 = vrot.slane %v353, 4
    %v355 = vadd.f32 %v353, %v354
    %v356 = vrot.slane %v355, 2
    %v357 = vadd.f32 %v355, %v356
    %v358 = vrot.slane %v357, 1
    %v359 = vadd.f32 %v357, %v358
    %v360 = vsel %vm105, %v254, 0.0
    %v361 = vrot.slane %v360, 4
    %v362 = vadd.f32 %v360, %v361
    %v363 = vrot.slane %v362, 2
    %v364 = vadd.f32 %v362, %v363
    %v365 = vrot.slane %v364, 1
    %v366 = vadd.f32 %v364, %v365
    %v367 = vadd.f32 %v261, 0.0
    %v368 = vadd.f32 %v268, 0.0
    %v369 = vadd.f32 %v275, 0.0
    %v370 = vadd.f32 %v282, 0.0
    %v371 = vadd.f32 %v289, 0.0
    %v372 = vadd.f32 %v296, 0.0
    %v373 = vadd.f32 %v303, 0.0
    %v374 = vadd.f32 %v310, 0.0
    %v375 = vadd.f32 %v317, 0.0
    %v376 = vadd.f32 %v324, 0.0
    %v377 = vadd.f32 %v331, 0.0
    %v378 = vadd.f32 %v338, 0.0
    %v379 = vadd.f32 %v345, 0.0
    %v380 = vadd.f32 %v352, 0.0
    %v381 = vadd.f32 %v359, 0.0
    %v382 = vadd.f32 %v366, 0.0
    %vm399 = vcmask 1041409
    %v400 = vsel %vm399, %v368, %v367
    %vm401 = vcmask 1042434
    %v402 = vsel %vm401, %v369, %v400
    %vm403 = vcmask 1043459
    %v404 = vsel %vm403, %v370, %v402
    %vm405 = vcmask 1044484
    %v406 = vsel %vm405, %v371, %v404
    %vm407 = vcmask 1045509
    %v408 = vsel %vm407, %v372, %v406
    %vm409 = vcmask 1046534
    %v410 = vsel %vm409, %v373, %v408
    %vm411 = vcmask 1047559
    %v412 = vsel %vm411, %v374, %v410
    %v413 = vsel %vm399, %v376, %v375
    %v414 = vsel %vm401, %v377, %v413
    %v415 = vsel %vm403, %v378, %v414
    %v416 = vsel %vm405, %v379, %v415
    %v417 = vsel %vm407, %v380, %v416
    %v418 = vsel %vm409, %v381, %v417
    %v419 = vsel %vm411, %v382, %v418
    %v420 = vsel %vm105, %v412, 0
    %v422 = vsel %vm105, %v419, 0
    %424 = vmatprep.subr.mxu0 0.0
    %425 = vmatpush1.msra.mxu0 %v97
    %426 = vmatprep.subr.mxu0 0.0
    %427 = vmatpush1.msra.mxu0 %v98
    %428 = vmatprep.subr.mxu0 0.0
    %429 = vmatpush1.msra.mxu0 0.0
    %430 = vmatprep.subr.mxu0 0.0
    %431 = vmatpush1.msra.mxu0 0.0
    %432 = vmatprep.subr.mxu0 0.0
    %433 = vmatpush1.msra.mxu0 0.0
    %434 = vmatprep.subr.mxu0 0.0
    %435 = vmatpush1.msra.mxu0 0.0
    %436 = vmatprep.subr.mxu0 0.0
    %437 = vmatpush1.msra.mxu0 0.0
    %438 = vmatprep.subr.mxu0 0.0
    %439 = vmatpush1.msra.mxu0 0.0
    %440 = vmatprep.subr.mxu0 0.0
    %441 = vmatpush1.msra.mxu0 0.0
    %442 = vmatprep.subr.mxu0 0.0
    %443 = vmatpush1.msra.mxu0 0.0
    %444 = vmatprep.subr.mxu0 0.0
    %445 = vmatpush1.msra.mxu0 0.0
    %446 = vmatprep.subr.mxu0 0.0
    %447 = vmatpush1.msra.mxu0 0.0
    %448 = vmatprep.subr.mxu0 0.0
    %449 = vmatpush1.msra.mxu0 0.0
    %450 = vmatprep.subr.mxu0 0.0
    %451 = vmatpush1.msra.mxu0 0.0
    %452 = vmatprep.subr.mxu0 0.0
    %453 = vmatpush1.msra.mxu0 0.0
    %454 = vmatprep.subr.mxu0 0.0
    %455 = vmatpush1.msra.mxu0 0.0
    %456 = vmatprep.subr.mxu0 0.0
    %457 = vmatpush1.msra.mxu0 0.0
    %458 = vmatprep.subr.mxu0 0.0
    %459 = vmatpush1.msra.mxu0 0.0
    %460 = vmatprep.subr.mxu0 0.0
    %461 = vmatpush1.msra.mxu0 0.0
    %462 = vmatprep.subr.mxu0 0.0
    %463 = vmatpush1.msra.mxu0 0.0
    %464 = vmatprep.subr.mxu0 0.0
    %465 = vmatpush1.msra.mxu0 0.0
    %466 = vmatprep.subr.mxu0 0.0
    %467 = vmatpush1.msra.mxu0 0.0
    %468 = vmatprep.subr.mxu0 0.0
    %469 = vmatpush1.msra.mxu0 0.0
    %470 = vmatprep.subr.mxu0 0.0
    %471 = vmatpush1.msra.mxu0 0.0
    %472 = vmatprep.subr.mxu0 0.0
    %473 = vmatpush1.msra.mxu0 0.0
    %474 = vmatprep.subr.mxu0 0.0
    %475 = vmatpush1.msra.mxu0 0.0
    %476 = vmatprep.subr.mxu0 0.0
    %477 = vmatpush1.msra.mxu0 0.0
    %478 = vmatprep.subr.mxu0 0.0
    %479 = vmatpush1.msra.mxu0 0.0
    %480 = vmatprep.subr.mxu0 0.0
    %481 = vmatpush1.msra.mxu0 0.0
    %482 = vmatprep.subr.mxu0 0.0
    %483 = vmatpush1.msra.mxu0 0.0
    %484 = vmatprep.subr.mxu0 0.0
    %485 = vmatpush1.msra.mxu0 0.0
    %486 = vmatprep.subr.mxu0 0.0
    %487 = vmatpush1.msra.mxu0 0.0
    %488 = vmatprep.mubr.f32.mxu0 0.0
    %489 = vmatmul.mubr.f32.gmra.mrb[0].mxu0 %v420
    %v490 = vpop.f32.mrb[0].mxu0
    %v491 = vadd.f32 0.0, %v490
    %v492 = vpop.f32.mrb[0].mxu0
    %493 = vmatprep.mubr.f32.mxu0 0.0
    %494 = vmatmul.mubr.f32.gmra.mrb[0].mxu0 %v422
    %v495 = vpop.f32.mrb[0].mxu0
    %v496 = vadd.f32 0.0, %v495
    %v497 = vpop.f32.mrb[0].mxu0
    %498 = vdwg.mxu0
    %499 = vmatprep.subr.mxu0 0.0
    %500 = vmatpush1.msra.mxu0 %v95
    %501 = vmatprep.subr.mxu0 0.0
    %502 = vmatpush1.msra.mxu0 %v96
    %503 = vmatprep.subr.mxu0 0.0
    %504 = vmatpush1.msra.mxu0 0.0
    %505 = vmatprep.subr.mxu0 0.0
    %506 = vmatpush1.msra.mxu0 0.0
    %507 = vmatprep.subr.mxu0 0.0
    %508 = vmatpush1.msra.mxu0 0.0
    %509 = vmatprep.subr.mxu0 0.0
    %510 = vmatpush1.msra.mxu0 0.0
    %511 = vmatprep.subr.mxu0 0.0
    %512 = vmatpush1.msra.mxu0 0.0
    %513 = vmatprep.subr.mxu0 0.0
    %514 = vmatpush1.msra.mxu0 0.0
    %515 = vmatprep.subr.mxu0 0.0
    %516 = vmatpush1.msra.mxu0 0.0
    %517 = vmatprep.subr.mxu0 0.0
    %518 = vmatpush1.msra.mxu0 0.0
    %519 = vmatprep.subr.mxu0 0.0
    %520 = vmatpush1.msra.mxu0 0.0
    %521 = vmatprep.subr.mxu0 0.0
    %522 = vmatpush1.msra.mxu0 0.0
    %523 = vmatprep.subr.mxu0 0.0
    %524 = vmatpush1.msra.mxu0 0.0
    %525 = vmatprep.subr.mxu0 0.0
    %526 = vmatpush1.msra.mxu0 0.0
    %527 = vmatprep.subr.mxu0 0.0
    %528 = vmatpush1.msra.mxu0 0.0
    %529 = vmatprep.subr.mxu0 0.0
    %530 = vmatpush1.msra.mxu0 0.0
    %531 = vmatprep.subr.mxu0 0.0
    %532 = vmatpush1.msra.mxu0 0.0
    %533 = vmatprep.subr.mxu0 0.0
    %534 = vmatpush1.msra.mxu0 0.0
    %535 = vmatprep.subr.mxu0 0.0
    %536 = vmatpush1.msra.mxu0 0.0
    %537 = vmatprep.subr.mxu0 0.0
    %538 = vmatpush1.msra.mxu0 0.0
    %539 = vmatprep.subr.mxu0 0.0
    %540 = vmatpush1.msra.mxu0 0.0
    %541 = vmatprep.subr.mxu0 0.0
    %542 = vmatpush1.msra.mxu0 0.0
    %543 = vmatprep.subr.mxu0 0.0
    %544 = vmatpush1.msra.mxu0 0.0
    %545 = vmatprep.subr.mxu0 0.0
    %546 = vmatpush1.msra.mxu0 0.0
    %547 = vmatprep.subr.mxu0 0.0
    %548 = vmatpush1.msra.mxu0 0.0
    %549 = vmatprep.subr.mxu0 0.0
    %550 = vmatpush1.msra.mxu0 0.0
    %551 = vmatprep.subr.mxu0 0.0
    %552 = vmatpush1.msra.mxu0 0.0
    %553 = vmatprep.subr.mxu0 0.0
    %554 = vmatpush1.msra.mxu0 0.0
    %555 = vmatprep.subr.mxu0 0.0
    %556 = vmatpush1.msra.mxu0 0.0
    %557 = vmatprep.subr.mxu0 0.0
    %558 = vmatpush1.msra.mxu0 0.0
    %559 = vmatprep.subr.mxu0 0.0
    %560 = vmatpush1.msra.mxu0 0.0
    %561 = vmatprep.subr.mxu0 0.0
    %562 = vmatpush1.msra.mxu0 0.0
    %563 = vmatprep.mubr.f32.mxu0 0.0
    %564 = vmatmul.mubr.f32.gmra.mrb[0].mxu0 %v107
    %v565 = vpop.f32.mrb[0].mxu0
    %v566 = vadd.f32 %v491, %v565
    %v567 = vpop.f32.mrb[0].mxu0
    %568 = vmatprep.mubr.f32.mxu0 0.0
    %569 = vmatmul.mubr.f32.gmra.mrb[0].mxu0 %v110
    %v570 = vpop.f32.mrb[0].mxu0
    %v571 = vadd.f32 %v496, %v570
    %v572 = vpop.f32.mrb[0].mxu0
    %573 = vdwg.mxu0
    %v575 = vlaneseq
    %v576 = vshrl.u32 %v575, 7
    %v577 = vsub.s32 0, %v576
    %v578 = vrot.slane %v99, %v577
    %v580 = vadd.f32 %v566, %v578
    %v581 = vadd.f32 %v571, %v578
    %v582 = vmax.f32 %v580, 0.0
    %v583 = vmax.f32 %v581, 0.0
    %vm584 = vcmp.gt.f32.partialorder %v91, 0.0
    %vm585 = vcmp.gt.f32.partialorder %v92, 0.0
    %v586 = vsel %vm584, 1, 0
    %v587 = vsel %vm585, 1, 0
    %588 = vset.pattern.permute.xlu0 0
    %589 = vperm.xlu0 %588, %v586
    %v590 = vpop.permute.xlu0 %589
    %591 = vset.pattern.permute.xlu0 0
    %592 = vperm.xlu0 %591, %v587
    %v593 = vpop.permute.xlu0 %592
    %vm594 = vcmp.eq.s32.totalorder %v590, 1
    %vm595 = vcmp.eq.s32.totalorder %v593, 1
    %v596 = vsel %vm594, %v582, %v89
    %v597 = vsel %vm595, %v583, %v90
    %v599 = vsel %vm105, %v596, 0
    %v602 = vsel %vm105, %v597, 0
    %604 = vmatprep.subr.mxu0 0.0
    %605 = vmatpush1.msra.mxu0 %v93
    %606 = vmatprep.subr.mxu0 0.0
    %607 = vmatpush1.msra.mxu0 %v94
    %608 = vmatprep.subr.mxu0 0.0
    %609 = vmatpush1.msra.mxu0 0.0
    %610 = vmatprep.subr.mxu0 0.0
    %611 = vmatpush1.msra.mxu0 0.0
    %612 = vmatprep.subr.mxu0 0.0
    %613 = vmatpush1.msra.mxu0 0.0
    %614 = vmatprep.subr.mxu0 0.0
    %615 = vmatpush1.msra.mxu0 0.0
    %616 = vmatprep.subr.mxu0 0.0
    %617 = vmatpush1.msra.mxu0 0.0
    %618 = vmatprep.subr.mxu0 0.0
    %619 = vmatpush1.msra.mxu0 0.0
    %620 = vmatprep.subr.mxu0 0.0
    %621 = vmatpush1.msra.mxu0 0.0
    %622 = vmatprep.subr.mxu0 0.0
    %623 = vmatpush1.msra.mxu0 0.0
    %624 = vmatprep.subr.mxu0 0.0
    %625 = vmatpush1.msra.mxu0 0.0
    %626 = vmatprep.subr.mxu0 0.0
    %627 = vmatpush1.msra.mxu0 0.0
    %628 = vmatprep.subr.mxu0 0.0
    %629 = vmatpush1.msra.mxu0 0.0
    %630 = vmatprep.subr.mxu0 0.0
    %631 = vmatpush1.msra.mxu0 0.0
    %632 = vmatprep.subr.mxu0 0.0
    %633 = vmatpush1.msra.mxu0 0.0
    %634 = vmatprep.subr.mxu0 0.0
    %635 = vmatpush1.msra.mxu0 0.0
    %636 = vmatprep.subr.mxu0 0.0
    %637 = vmatpush1.msra.mxu0 0.0
    %638 = vmatprep.subr.mxu0 0.0
    %639 = vmatpush1.msra.mxu0 0.0
    %640 = vmatprep.subr.mxu0 0.0
    %641 = vmatpush1.msra.mxu0 0.0
    %642 = vmatprep.subr.mxu0 0.0
    %643 = vmatpush1.msra.mxu0 0.0
    %644 = vmatprep.subr.mxu0 0.0
    %645 = vmatpush1.msra.mxu0 0.0
    %646 = vmatprep.subr.mxu0 0.0
    %647 = vmatpush1.msra.mxu0 0.0
    %648 = vmatprep.subr.mxu0 0.0
    %649 = vmatpush1.msra.mxu0 0.0
    %650 = vmatprep.subr.mxu0 0.0
    %651 = vmatpush1.msra.mxu0 0.0
    %652 = vmatprep.subr.mxu0 0.0
    %653 = vmatpush1.msra.mxu0 0.0
    %654 = vmatprep.subr.mxu0 0.0
    %655 = vmatpush1.msra.mxu0 0.0
    %656 = vmatprep.subr.mxu0 0.0
    %657 = vmatpush1.msra.mxu0 0.0
    %658 = vmatprep.subr.mxu0 0.0
    %659 = vmatpush1.msra.mxu0 0.0
    %660 = vmatprep.subr.mxu0 0.0
    %661 = vmatpush1.msra.mxu0 0.0
    %662 = vmatprep.subr.mxu0 0.0
    %663 = vmatpush1.msra.mxu0 0.0
    %664 = vmatprep.subr.mxu0 0.0
    %665 = vmatpush1.msra.mxu0 0.0
    %666 = vmatprep.subr.mxu0 0.0
    %667 = vmatpush1.msra.mxu0 0.0
    %668 = vmatprep.mubr.f32.mxu0 0.0
    %669 = vmatmul.mubr.f32.gmra.mrb[0].mxu0 %v599
    %v670 = vpop.f32.mrb[0].mxu0
    %v671 = vadd.f32 0.0, %v670
    %v672 = vpop.f32.mrb[0].mxu0
    %673 = vmatprep.mubr.f32.mxu0 0.0
    %674 = vmatmul.mubr.f32.gmra.mrb[0].mxu0 %v602
    %v675 = vpop.f32.mrb[0].mxu0
    %v676 = vadd.f32 0.0, %v675
    %v677 = vpop.f32.mrb[0].mxu0
    %678 = vdwg.mxu0
    %679 = vst.msk [vmem:[#allocation2] sm:$0xff] %vm105, %v671
    %680 = vst.msk [vmem:[#allocation2 + $0x8] sm:$0xff] %vm105, %v676
    %v681 = vld [vmem:[%s2] sm:$0xf]
    %v682 = vld [vmem:[%s2 + $0x4] sm:$0xf]
    %v683 = vld [vmem:[%s2 + $0x8] sm:$0xf]
    %v684 = vld [vmem:[%s2 + $0xc] sm:$0xf]
    %v685 = vld [vmem:[%s2 + $0x10] sm:$0xf]
    %v686 = vld [vmem:[%s2 + $0x14] sm:$0xf]
    %v687 = vld [vmem:[%s2 + $0x18] sm:$0xf]
    %v688 = vld [vmem:[%s2 + $0x1c] sm:$0xf]
    %v689 = vld [vmem:[%s2 + $0x20] sm:$0xf]
    %v690 = vld [vmem:[%s2 + $0x24] sm:$0xf]
    %v691 = vld [vmem:[%s2 + $0x28] sm:$0xf]
    %v692 = vld [vmem:[%s2 + $0x2c] sm:$0xf]
    %v693 = vld [vmem:[%s2 + $0x30] sm:$0xf]
    %v694 = vld [vmem:[%s2 + $0x34] sm:$0xf]
    %v695 = vld [vmem:[%s2 + $0x38] sm:$0xf]
    %v696 = vld [vmem:[%s2 + $0x3c] sm:$0xf]
    %v697 = vunpack.c.l.bf16 %v681
    %v698 = vunpack.c.l.bf16 %v682
    %v699 = vunpack.c.l.bf16 %v683
    %v700 = vunpack.c.l.bf16 %v684
    %v701 = vunpack.c.l.bf16 %v685
    %v702 = vunpack.c.l.bf16 %v686
    %v703 = vunpack.c.l.bf16 %v687
    %v704 = vunpack.c.l.bf16 %v688
    %v705 = vunpack.c.l.bf16 %v689
    %v706 = vunpack.c.l.bf16 %v690
    %v707 = vunpack.c.l.bf16 %v691
    %v708 = vunpack.c.l.bf16 %v692
    %v709 = vunpack.c.l.bf16 %v693
    %v710 = vunpack.c.l.bf16 %v694
    %v711 = vunpack.c.l.bf16 %v695
    %v712 = vunpack.c.l.bf16 %v696
    %v713 = vld [vmem:[#allocation2] sm:$0xff]
    %v714 = vld [vmem:[#allocation2 + $0x8] sm:$0xff]
    %v715 = vadd.f32 %v697, %v713
    %v716 = vadd.f32 %v698, %v713
    %v717 = vadd.f32 %v699, %v713
    %v718 = vadd.f32 %v700, %v713
    %v719 = vadd.f32 %v701, %v713
    %v720 = vadd.f32 %v702, %v713
    %v721 = vadd.f32 %v703, %v713
    %v722 = vadd.f32 %v704, %v713
    %v723 = vadd.f32 %v705, %v714
    %v724 = vadd.f32 %v706, %v714
    %v725 = vadd.f32 %v707, %v714
    %v726 = vadd.f32 %v708, %v714
    %v727 = vadd.f32 %v709, %v714
    %v728 = vadd.f32 %v710, %v714
    %v729 = vadd.f32 %v711, %v714
    %v730 = vadd.f32 %v712, %v714
    %v731 = vmax.f32 %v715, 0.0
    %v732 = vmax.f32 %v716, 0.0
    %v733 = vmax.f32 %v717, 0.0
    %v734 = vmax.f32 %v718, 0.0
    %v735 = vmax.f32 %v719, 0.0
    %v736 = vmax.f32 %v720, 0.0
    %v737 = vmax.f32 %v721, 0.0
    %v738 = vmax.f32 %v722, 0.0
    %v739 = vmax.f32 %v723, 0.0
    %v740 = vmax.f32 %v724, 0.0
    %v741 = vmax.f32 %v725, 0.0
    %v742 = vmax.f32 %v726, 0.0
    %v743 = vmax.f32 %v727, 0.0
    %v744 = vmax.f32 %v728, 0.0
    %v745 = vmax.f32 %v729, 0.0
    %v746 = vmax.f32 %v730, 0.0
    %v747 = vsel %vm105, %v731, 0.0
    %v748 = vrot.slane %v747, 4
    %v749 = vadd.f32 %v747, %v748
    %v750 = vrot.slane %v749, 2
    %v751 = vadd.f32 %v749, %v750
    %v752 = vrot.slane %v751, 1
    %v753 = vadd.f32 %v751, %v752
    %v754 = vsel %vm105, %v732, 0.0
    %v755 = vrot.slane %v754, 4
    %v756 = vadd.f32 %v754, %v755
    %v757 = vrot.slane %v756, 2
    %v758 = vadd.f32 %v756, %v757
    %v759 = vrot.slane %v758, 1
    %v760 = vadd.f32 %v758, %v759
    %v761 = vsel %vm105, %v733, 0.0
    %v762 = vrot.slane %v761, 4
    %v763 = vadd.f32 %v761, %v762
    %v764 = vrot.slane %v763, 2
    %v765 = vadd.f32 %v763, %v764
    %v766 = vrot.slane %v765, 1
    %v767 = vadd.f32 %v765, %v766
    %v768 = vsel %vm105, %v734, 0.0
    %v769 = vrot.slane %v768, 4
    %v770 = vadd.f32 %v768, %v769
    %v771 = vrot.slane %v770, 2
    %v772 = vadd.f32 %v770, %v771
    %v773 = vrot.slane %v772, 1
    %v774 = vadd.f32 %v772, %v773
    %v775 = vsel %vm105, %v735, 0.0
    %v776 = vrot.slane %v775, 4
    %v777 = vadd.f32 %v775, %v776
    %v778 = vrot.slane %v777, 2
    %v779 = vadd.f32 %v777, %v778
    %v780 = vrot.slane %v779, 1
    %v781 = vadd.f32 %v779, %v780
    %v782 = vsel %vm105, %v736, 0.0
    %v783 = vrot.slane %v782, 4
    %v784 = vadd.f32 %v782, %v783
    %v785 = vrot.slane %v784, 2
    %v786 = vadd.f32 %v784, %v785
    %v787 = vrot.slane %v786, 1
    %v788 = vadd.f32 %v786, %v787
    %v789 = vsel %vm105, %v737, 0.0
    %v790 = vrot.slane %v789, 4
    %v791 = vadd.f32 %v789, %v790
    %v792 = vrot.slane %v791, 2
    %v793 = vadd.f32 %v791, %v792
    %v794 = vrot.slane %v793, 1
    %v795 = vadd.f32 %v793, %v794
    %v796 = vsel %vm105, %v738, 0.0
    %v797 = vrot.slane %v796, 4
    %v798 = vadd.f32 %v796, %v797
    %v799 = vrot.slane %v798, 2
    %v800 = vadd.f32 %v798, %v799
    %v801 = vrot.slane %v800, 1
    %v802 = vadd.f32 %v800, %v801
    %v803 = vsel %vm105, %v739, 0.0
    %v804 = vrot.slane %v803, 4
    %v805 = vadd.f32 %v803, %v804
    %v806 = vrot.slane %v805, 2
    %v807 = vadd.f32 %v805, %v806
    %v808 = vrot.slane %v807, 1
    %v809 = vadd.f32 %v807, %v808
    %v810 = vsel %vm105, %v740, 0.0
    %v811 = vrot.slane %v810, 4
    %v812 = vadd.f32 %v810, %v811
    %v813 = vrot.slane %v812, 2
    %v814 = vadd.f32 %v812, %v813
    %v815 = vrot.slane %v814, 1
    %v816 = vadd.f32 %v814, %v815
    %v817 = vsel %vm105, %v741, 0.0
    %v818 = vrot.slane %v817, 4
    %v819 = vadd.f32 %v817, %v818
    %v820 = vrot.slane %v819, 2
    %v821 = vadd.f32 %v819, %v820
    %v822 = vrot.slane %v821, 1
    %v823 = vadd.f32 %v821, %v822
    %v824 = vsel %vm105, %v742, 0.0
    %v825 = vrot.slane %v824, 4
    %v826 = vadd.f32 %v824, %v825
    %v827 = vrot.slane %v826, 2
    %v828 = vadd.f32 %v826, %v827
    %v829 = vrot.slane %v828, 1
    %v830 = vadd.f32 %v828, %v829
    %v831 = vsel %vm105, %v743, 0.0
    %v832 = vrot.slane %v831, 4
    %v833 = vadd.f32 %v831, %v832
    %v834 = vrot.slane %v833, 2
    %v835 = vadd.f32 %v833, %v834
    %v836 = vrot.slane %v835, 1
    %v837 = vadd.f32 %v835, %v836
    %v838 = vsel %vm105, %v744, 0.0
    %v839 = vrot.slane %v838, 4
    %v840 = vadd.f32 %v838, %v839
    %v841 = vrot.slane %v840, 2
    %v842 = vadd.f32 %v840, %v841
    %v843 = vrot.slane %v842, 1
    %v844 = vadd.f32 %v842, %v843
    %v845 = vsel %vm105, %v745, 0.0
    %v846 = vrot.slane %v845, 4
    %v847 = vadd.f32 %v845, %v846
    %v848 = vrot.slane %v847, 2
    %v849 = vadd.f32 %v847, %v848
    %v850 = vrot.slane %v849, 1
    %v851 = vadd.f32 %v849, %v850
    %v852 = vsel %vm105, %v746, 0.0
    %v853 = vrot.slane %v852, 4
    %v854 = vadd.f32 %v852, %v853
    %v855 = vrot.slane %v854, 2
    %v856 = vadd.f32 %v854, %v855
    %v857 = vrot.slane %v856, 1
    %v858 = vadd.f32 %v856, %v857
    %v859 = vadd.f32 %v753, 0.0
    %v860 = vadd.f32 %v760, 0.0
    %v861 = vadd.f32 %v767, 0.0
    %v862 = vadd.f32 %v774, 0.0
    %v863 = vadd.f32 %v781, 0.0
    %v864 = vadd.f32 %v788, 0.0
    %v865 = vadd.f32 %v795, 0.0
    %v866 = vadd.f32 %v802, 0.0
    %v867 = vadd.f32 %v809, 0.0
    %v868 = vadd.f32 %v816, 0.0
    %v869 = vadd.f32 %v823, 0.0
    %v870 = vadd.f32 %v830, 0.0
    %v871 = vadd.f32 %v837, 0.0
    %v872 = vadd.f32 %v844, 0.0
    %v873 = vadd.f32 %v851, 0.0
    %v874 = vadd.f32 %v858, 0.0
    %v891 = vsel %vm399, %v860, %v859
    %v892 = vsel %vm401, %v861, %v891
    %v893 = vsel %vm403, %v862, %v892
    %v894 = vsel %vm405, %v863, %v893
    %v895 = vsel %vm407, %v864, %v894
    %v896 = vsel %vm409, %v865, %v895
    %v897 = vsel %vm411, %v866, %v896
    %v898 = vsel %vm399, %v868, %v867
    %v899 = vsel %vm401, %v869, %v898
    %v900 = vsel %vm403, %v870, %v899
    %v901 = vsel %vm405, %v871, %v900
    %v902 = vsel %vm407, %v872, %v901
    %v903 = vsel %vm409, %v873, %v902
    %v904 = vsel %vm411, %v874, %v903
    %v905 = vsel %vm105, %v897, 0
    %v907 = vsel %vm105, %v904, 0
    %909 = vmatprep.subr.mxu0 0.0
    %910 = vmatpush1.msra.mxu0 %v97
    %911 = vmatprep.subr.mxu0 0.0
    %912 = vmatpush1.msra.mxu0 %v98
    %913 = vmatprep.subr.mxu0 0.0
    %914 = vmatpush1.msra.mxu0 0.0
    %915 = vmatprep.subr.mxu0 0.0
    %916 = vmatpush1.msra.mxu0 0.0
    %917 = vmatprep.subr.mxu0 0.0
    %918 = vmatpush1.msra.mxu0 0.0
    %919 = vmatprep.subr.mxu0 0.0
    %920 = vmatpush1.msra.mxu0 0.0
    %921 = vmatprep.subr.mxu0 0.0
    %922 = vmatpush1.msra.mxu0 0.0
    %923 = vmatprep.subr.mxu0 0.0
    %924 = vmatpush1.msra.mxu0 0.0
    %925 = vmatprep.subr.mxu0 0.0
    %926 = vmatpush1.msra.mxu0 0.0
    %927 = vmatprep.subr.mxu0 0.0
    %928 = vmatpush1.msra.mxu0 0.0
    %929 = vmatprep.subr.mxu0 0.0
    %930 = vmatpush1.msra.mxu0 0.0
    %931 = vmatprep.subr.mxu0 0.0
    %932 = vmatpush1.msra.mxu0 0.0
    %933 = vmatprep.subr.mxu0 0.0
    %934 = vmatpush1.msra.mxu0 0.0
    %935 = vmatprep.subr.mxu0 0.0
    %936 = vmatpush1.msra.mxu0 0.0
    %937 = vmatprep.subr.mxu0 0.0
    %938 = vmatpush1.msra.mxu0 0.0
    %939 = vmatprep.subr.mxu0 0.0
    %940 = vmatpush1.msra.mxu0 0.0
    %941 = vmatprep.subr.mxu0 0.0
    %942 = vmatpush1.msra.mxu0 0.0
    %943 = vmatprep.subr.mxu0 0.0
    %944 = vmatpush1.msra.mxu0 0.0
    %945 = vmatprep.subr.mxu0 0.0
    %946 = vmatpush1.msra.mxu0 0.0
    %947 = vmatprep.subr.mxu0 0.0
    %948 = vmatpush1.msra.mxu0 0.0
    %949 = vmatprep.subr.mxu0 0.0
    %950 = vmatpush1.msra.mxu0 0.0
    %951 = vmatprep.subr.mxu0 0.0
    %952 = vmatpush1.msra.mxu0 0.0
    %953 = vmatprep.subr.mxu0 0.0
    %954 = vmatpush1.msra.mxu0 0.0
    %955 = vmatprep.subr.mxu0 0.0
    %956 = vmatpush1.msra.mxu0 0.0
    %957 = vmatprep.subr.mxu0 0.0
    %958 = vmatpush1.msra.mxu0 0.0
    %959 = vmatprep.subr.mxu0 0.0
    %960 = vmatpush1.msra.mxu0 0.0
    %961 = vmatprep.subr.mxu0 0.0
    %962 = vmatpush1.msra.mxu0 0.0
    %963 = vmatprep.subr.mxu0 0.0
    %964 = vmatpush1.msra.mxu0 0.0
    %965 = vmatprep.subr.mxu0 0.0
    %966 = vmatpush1.msra.mxu0 0.0
    %967 = vmatprep.subr.mxu0 0.0
    %968 = vmatpush1.msra.mxu0 0.0
    %969 = vmatprep.subr.mxu0 0.0
    %970 = vmatpush1.msra.mxu0 0.0
    %971 = vmatprep.subr.mxu0 0.0
    %972 = vmatpush1.msra.mxu0 0.0
    %973 = vmatprep.mubr.f32.mxu0 0.0
    %974 = vmatmul.mubr.f32.gmra.mrb[0].mxu0 %v905
    %v975 = vpop.f32.mrb[0].mxu0
    %v976 = vadd.f32 0.0, %v975
    %v977 = vpop.f32.mrb[0].mxu0
    %978 = vmatprep.mubr.f32.mxu0 0.0
    %979 = vmatmul.mubr.f32.gmra.mrb[0].mxu0 %v907
    %v980 = vpop.f32.mrb[0].mxu0
    %v981 = vadd.f32 0.0, %v980
    %v982 = vpop.f32.mrb[0].mxu0
    %983 = vdwg.mxu0
    %984 = vmatprep.subr.mxu0 0.0
    %985 = vmatpush1.msra.mxu0 %v95
    %986 = vmatprep.subr.mxu0 0.0
    %987 = vmatpush1.msra.mxu0 %v96
    %988 = vmatprep.subr.mxu0 0.0
    %989 = vmatpush1.msra.mxu0 0.0
    %990 = vmatprep.subr.mxu0 0.0
    %991 = vmatpush1.msra.mxu0 0.0
    %992 = vmatprep.subr.mxu0 0.0
    %993 = vmatpush1.msra.mxu0 0.0
    %994 = vmatprep.subr.mxu0 0.0
    %995 = vmatpush1.msra.mxu0 0.0
    %996 = vmatprep.subr.mxu0 0.0
    %997 = vmatpush1.msra.mxu0 0.0
    %998 = vmatprep.subr.mxu0 0.0
    %999 = vmatpush1.msra.mxu0 0.0
    %1000 = vmatprep.subr.mxu0 0.0
    %1001 = vmatpush1.msra.mxu0 0.0
    %1002 = vmatprep.subr.mxu0 0.0
    %1003 = vmatpush1.msra.mxu0 0.0
    %1004 = vmatprep.subr.mxu0 0.0
    %1005 = vmatpush1.msra.mxu0 0.0
    %1006 = vmatprep.subr.mxu0 0.0
    %1007 = vmatpush1.msra.mxu0 0.0
    %1008 = vmatprep.subr.mxu0 0.0
    %1009 = vmatpush1.msra.mxu0 0.0
    %1010 = vmatprep.subr.mxu0 0.0
    %1011 = vmatpush1.msra.mxu0 0.0
    %1012 = vmatprep.subr.mxu0 0.0
    %1013 = vmatpush1.msra.mxu0 0.0
    %1014 = vmatprep.subr.mxu0 0.0
    %1015 = vmatpush1.msra.mxu0 0.0
    %1016 = vmatprep.subr.mxu0 0.0
    %1017 = vmatpush1.msra.mxu0 0.0
    %1018 = vmatprep.subr.mxu0 0.0
    %1019 = vmatpush1.msra.mxu0 0.0
    %1020 = vmatprep.subr.mxu0 0.0
    %1021 = vmatpush1.msra.mxu0 0.0
    %1022 = vmatprep.subr.mxu0 0.0
    %1023 = vmatpush1.msra.mxu0 0.0
    %1024 = vmatprep.subr.mxu0 0.0
    %1025 = vmatpush1.msra.mxu0 0.0
    %1026 = vmatprep.subr.mxu0 0.0
    %1027 = vmatpush1.msra.mxu0 0.0
    %1028 = vmatprep.subr.mxu0 0.0
    %1029 = vmatpush1.msra.mxu0 0.0
    %1030 = vmatprep.subr.mxu0 0.0
    %1031 = vmatpush1.msra.mxu0 0.0
    %1032 = vmatprep.subr.mxu0 0.0
    %1033 = vmatpush1.msra.mxu0 0.0
    %1034 = vmatprep.subr.mxu0 0.0
    %1035 = vmatpush1.msra.mxu0 0.0
    %1036 = vmatprep.subr.mxu0 0.0
    %1037 = vmatpush1.msra.mxu0 0.0
    %1038 = vmatprep.subr.mxu0 0.0
    %1039 = vmatpush1.msra.mxu0 0.0
    %1040 = vmatprep.subr.mxu0 0.0
    %1041 = vmatpush1.msra.mxu0 0.0
    %1042 = vmatprep.subr.mxu0 0.0
    %1043 = vmatpush1.msra.mxu0 0.0
    %1044 = vmatprep.subr.mxu0 0.0
    %1045 = vmatpush1.msra.mxu0 0.0
    %1046 = vmatprep.subr.mxu0 0.0
    %1047 = vmatpush1.msra.mxu0 0.0
    %1048 = vmatprep.mubr.f32.mxu0 0.0
    %1049 = vmatmul.mubr.f32.gmra.mrb[0].mxu0 %v599
    %v1050 = vpop.f32.mrb[0].mxu0
    %v1051 = vadd.f32 %v976, %v1050
    %v1052 = vpop.f32.mrb[0].mxu0
    %1053 = vmatprep.mubr.f32.mxu0 0.0
    %1054 = vmatmul.mubr.f32.gmra.mrb[0].mxu0 %v602
    %v1055 = vpop.f32.mrb[0].mxu0
    %v1056 = vadd.f32 %v981, %v1055
    %v1057 = vpop.f32.mrb[0].mxu0
    %1058 = vdwg.mxu0
    %v1059 = vadd.f32 %v1051, %v578
    %v1060 = vadd.f32 %v1056, %v578
    %v1061 = vmax.f32 %v1059, 0.0
    %v1062 = vmax.f32 %v1060, 0.0
    %v1063 = vsel %vm594, %v1061, %v89
    %v1064 = vsel %vm595, %v1062, %v90
    %v1066 = vsel %vm105, %v1063, 0
    %v1069 = vsel %vm105, %v1064, 0
    %1071 = vmatprep.subr.mxu0 0.0
    %1072 = vmatpush1.msra.mxu0 %v93
    %1073 = vmatprep.subr.mxu0 0.0
    %1074 = vmatpush1.msra.mxu0 %v94
    %1075 = vmatprep.subr.mxu0 0.0
    %1076 = vmatpush1.msra.mxu0 0.0
    %1077 = vmatprep.subr.mxu0 0.0
    %1078 = vmatpush1.msra.mxu0 0.0
    %1079 = vmatprep.subr.mxu0 0.0
    %1080 = vmatpush1.msra.mxu0 0.0
    %1081 = vmatprep.subr.mxu0 0.0
    %1082 = vmatpush1.msra.mxu0 0.0
    %1083 = vmatprep.subr.mxu0 0.0
    %1084 = vmatpush1.msra.mxu0 0.0
    %1085 = vmatprep.subr.mxu0 0.0
    %1086 = vmatpush1.msra.mxu0 0.0
    %1087 = vmatprep.subr.mxu0 0.0
    %1088 = vmatpush1.msra.mxu0 0.0
    %1089 = vmatprep.subr.mxu0 0.0
    %1090 = vmatpush1.msra.mxu0 0.0
    %1091 = vmatprep.subr.mxu0 0.0
    %1092 = vmatpush1.msra.mxu0 0.0
    %1093 = vmatprep.subr.mxu0 0.0
    %1094 = vmatpush1.msra.mxu0 0.0
    %1095 = vmatprep.subr.mxu0 0.0
    %1096 = vmatpush1.msra.mxu0 0.0
    %1097 = vmatprep.subr.mxu0 0.0
    %1098 = vmatpush1.msra.mxu0 0.0
    %1099 = vmatprep.subr.mxu0 0.0
    %1100 = vmatpush1.msra.mxu0 0.0
    %1101 = vmatprep.subr.mxu0 0.0
    %1102 = vmatpush1.msra.mxu0 0.0
    %1103 = vmatprep.subr.mxu0 0.0
    %1104 = vmatpush1.msra.mxu0 0.0
    %1105 = vmatprep.subr.mxu0 0.0
    %1106 = vmatpush1.msra.mxu0 0.0
    %1107 = vmatprep.subr.mxu0 0.0
    %1108 = vmatpush1.msra.mxu0 0.0
    %1109 = vmatprep.subr.mxu0 0.0
    %1110 = vmatpush1.msra.mxu0 0.0
    %1111 = vmatprep.subr.mxu0 0.0
    %1112 = vmatpush1.msra.mxu0 0.0
    %1113 = vmatprep.subr.mxu0 0.0
    %1114 = vmatpush1.msra.mxu0 0.0
    %1115 = vmatprep.subr.mxu0 0.0
    %1116 = vmatpush1.msra.mxu0 0.0
    %1117 = vmatprep.subr.mxu0 0.0
    %1118 = vmatpush1.msra.mxu0 0.0
    %1119 = vmatprep.subr.mxu0 0.0
    %1120 = vmatpush1.msra.mxu0 0.0
    %1121 = vmatprep.subr.mxu0 0.0
    %1122 = vmatpush1.msra.mxu0 0.0
    %1123 = vmatprep.subr.mxu0 0.0
    %1124 = vmatpush1.msra.mxu0 0.0
    %1125 = vmatprep.subr.mxu0 0.0
    %1126 = vmatpush1.msra.mxu0 0.0
    %1127 = vmatprep.subr.mxu0 0.0
    %1128 = vmatpush1.msra.mxu0 0.0
    %1129 = vmatprep.subr.mxu0 0.0
    %1130 = vmatpush1.msra.mxu0 0.0
    %1131 = vmatprep.subr.mxu0 0.0
    %1132 = vmatpush1.msra.mxu0 0.0
    %1133 = vmatprep.subr.mxu0 0.0
    %1134 = vmatpush1.msra.mxu0 0.0
    %1135 = vmatprep.mubr.f32.mxu0 0.0
    %1136 = vmatmul.mubr.f32.gmra.mrb[0].mxu0 %v1066
    %v1137 = vpop.f32.mrb[0].mxu0
    %v1138 = vadd.f32 0.0, %v1137
    %v1139 = vpop.f32.mrb[0].mxu0
    %1140 = vmatprep.mubr.f32.mxu0 0.0
    %1141 = vmatmul.mubr.f32.gmra.mrb[0].mxu0 %v1069
    %v1142 = vpop.f32.mrb[0].mxu0
    %v1143 = vadd.f32 0.0, %v1142
    %v1144 = vpop.f32.mrb[0].mxu0
    %1145 = vdwg.mxu0
    %1146 = vst.msk [vmem:[#allocation2] sm:$0xff] %vm105, %v1138
    %1147 = vst.msk [vmem:[#allocation2 + $0x8] sm:$0xff] %vm105, %v1143
    %v1148 = vld [vmem:[%s2] sm:$0xf]
    %v1149 = vld [vmem:[%s2 + $0x4] sm:$0xf]
    %v1150 = vld [vmem:[%s2 + $0x8] sm:$0xf]
    %v1151 = vld [vmem:[%s2 + $0xc] sm:$0xf]
    %v1152 = vld [vmem:[%s2 + $0x10] sm:$0xf]
    %v1153 = vld [vmem:[%s2 + $0x14] sm:$0xf]
    %v1154 = vld [vmem:[%s2 + $0x18] sm:$0xf]
    %v1155 = vld [vmem:[%s2 + $0x1c] sm:$0xf]
    %v1156 = vld [vmem:[%s2 + $0x20] sm:$0xf]
    %v1157 = vld [vmem:[%s2 + $0x24] sm:$0xf]
    %v1158 = vld [vmem:[%s2 + $0x28] sm:$0xf]
    %v1159 = vld [vmem:[%s2 + $0x2c] sm:$0xf]
    %v1160 = vld [vmem:[%s2 + $0x30] sm:$0xf]
    %v1161 = vld [vmem:[%s2 + $0x34] sm:$0xf]
    %v1162 = vld [vmem:[%s2 + $0x38] sm:$0xf]
    %v1163 = vld [vmem:[%s2 + $0x3c] sm:$0xf]
    %v1164 = vunpack.c.l.bf16 %v1148
    %v1165 = vunpack.c.l.bf16 %v1149
    %v1166 = vunpack.c.l.bf16 %v1150
    %v1167 = vunpack.c.l.bf16 %v1151
    %v1168 = vunpack.c.l.bf16 %v1152
    %v1169 = vunpack.c.l.bf16 %v1153
    %v1170 = vunpack.c.l.bf16 %v1154
    %v1171 = vunpack.c.l.bf16 %v1155
    %v1172 = vunpack.c.l.bf16 %v1156
    %v1173 = vunpack.c.l.bf16 %v1157
    %v1174 = vunpack.c.l.bf16 %v1158
    %v1175 = vunpack.c.l.bf16 %v1159
    %v1176 = vunpack.c.l.bf16 %v1160
    %v1177 = vunpack.c.l.bf16 %v1161
    %v1178 = vunpack.c.l.bf16 %v1162
    %v1179 = vunpack.c.l.bf16 %v1163
    %v1180 = vld [vmem:[#allocation2] sm:$0xff]
    %v1181 = vld [vmem:[#allocation2 + $0x8] sm:$0xff]
    %v1182 = vadd.f32 %v1164, %v1180
    %v1183 = vadd.f32 %v1165, %v1180
    %v1184 = vadd.f32 %v1166, %v1180
    %v1185 = vadd.f32 %v1167, %v1180
    %v1186 = vadd.f32 %v1168, %v1180
    %v1187 = vadd.f32 %v1169, %v1180
    %v1188 = vadd.f32 %v1170, %v1180
    %v1189 = vadd.f32 %v1171, %v1180
    %v1190 = vadd.f32 %v1172, %v1181
    %v1191 = vadd.f32 %v1173, %v1181
    %v1192 = vadd.f32 %v1174, %v1181
    %v1193 = vadd.f32 %v1175, %v1181
    %v1194 = vadd.f32 %v1176, %v1181
    %v1195 = vadd.f32 %v1177, %v1181
    %v1196 = vadd.f32 %v1178, %v1181
    %v1197 = vadd.f32 %v1179, %v1181
    %v1198 = vmax.f32 %v1182, 0.0
    %v1199 = vmax.f32 %v1183, 0.0
    %v1200 = vmax.f32 %v1184, 0.0
    %v1201 = vmax.f32 %v1185, 0.0
    %v1202 = vmax.f32 %v1186, 0.0
    %v1203 = vmax.f32 %v1187, 0.0
    %v1204 = vmax.f32 %v1188, 0.0
    %v1205 = vmax.f32 %v1189, 0.0
    %v1206 = vmax.f32 %v1190, 0.0
    %v1207 = vmax.f32 %v1191, 0.0
    %v1208 = vmax.f32 %v1192, 0.0
    %v1209 = vmax.f32 %v1193, 0.0
    %v1210 = vmax.f32 %v1194, 0.0
    %v1211 = vmax.f32 %v1195, 0.0
    %v1212 = vmax.f32 %v1196, 0.0
    %v1213 = vmax.f32 %v1197, 0.0
    %v1214 = vsel %vm105, %v1198, 0.0
    %v1215 = vrot.slane %v1214, 4
    %v1216 = vadd.f32 %v1214, %v1215
    %v1217 = vrot.slane %v1216, 2
    %v1218 = vadd.f32 %v1216, %v1217
    %v1219 = vrot.slane %v1218, 1
    %v1220 = vadd.f32 %v1218, %v1219
    %v1221 = vsel %vm105, %v1199, 0.0
    %v1222 = vrot.slane %v1221, 4
    %v1223 = vadd.f32 %v1221, %v1222
    %v1224 = vrot.slane %v1223, 2
    %v1225 = vadd.f32 %v1223, %v1224
    %v1226 = vrot.slane %v1225, 1
    %v1227 = vadd.f32 %v1225, %v1226
    %v1228 = vsel %vm105, %v1200, 0.0
    %v1229 = vrot.slane %v1228, 4
    %v1230 = vadd.f32 %v1228, %v1229
    %v1231 = vrot.slane %v1230, 2
    %v1232 = vadd.f32 %v1230, %v1231
    %v1233 = vrot.slane %v1232, 1
    %v1234 = vadd.f32 %v1232, %v1233
    %v1235 = vsel %vm105, %v1201, 0.0
    %v1236 = vrot.slane %v1235, 4
    %v1237 = vadd.f32 %v1235, %v1236
    %v1238 = vrot.slane %v1237, 2
    %v1239 = vadd.f32 %v1237, %v1238
    %v1240 = vrot.slane %v1239, 1
    %v1241 = vadd.f32 %v1239, %v1240
    %v1242 = vsel %vm105, %v1202, 0.0
    %v1243 = vrot.slane %v1242, 4
    %v1244 = vadd.f32 %v1242, %v1243
    %v1245 = vrot.slane %v1244, 2
    %v1246 = vadd.f32 %v1244, %v1245
    %v1247 = vrot.slane %v1246, 1
    %v1248 = vadd.f32 %v1246, %v1247
    %v1249 = vsel %vm105, %v1203, 0.0
    %v1250 = vrot.slane %v1249, 4
    %v1251 = vadd.f32 %v1249, %v1250
    %v1252 = vrot.slane %v1251, 2
    %v1253 = vadd.f32 %v1251, %v1252
    %v1254 = vrot.slane %v1253, 1
    %v1255 = vadd.f32 %v1253, %v1254
    %v1256 = vsel %vm105, %v1204, 0.0
    %v1257 = vrot.slane %v1256, 4
    %v1258 = vadd.f32 %v1256, %v1257
    %v1259 = vrot.slane %v1258, 2
    %v1260 = vadd.f32 %v1258, %v1259
    %v1261 = vrot.slane %v1260, 1
    %v1262 = vadd.f32 %v1260, %v1261
    %v1263 = vsel %vm105, %v1205, 0.0
    %v1264 = vrot.slane %v1263, 4
    %v1265 = vadd.f32 %v1263, %v1264
    %v1266 = vrot.slane %v1265, 2
    %v1267 = vadd.f32 %v1265, %v1266
    %v1268 = vrot.slane %v1267, 1
    %v1269 = vadd.f32 %v1267, %v1268
    %v1270 = vsel %vm105, %v1206, 0.0
    %v1271 = vrot.slane %v1270, 4
    %v1272 = vadd.f32 %v1270, %v1271
    %v1273 = vrot.slane %v1272, 2
    %v1274 = vadd.f32 %v1272, %v1273
    %v1275 = vrot.slane %v1274, 1
    %v1276 = vadd.f32 %v1274, %v1275
    %v1277 = vsel %vm105, %v1207, 0.0
    %v1278 = vrot.slane %v1277, 4
    %v1279 = vadd.f32 %v1277, %v1278
    %v1280 = vrot.slane %v1279, 2
    %v1281 = vadd.f32 %v1279, %v1280
    %v1282 = vrot.slane %v1281, 1
    %v1283 = vadd.f32 %v1281, %v1282
    %v1284 = vsel %vm105, %v1208, 0.0
    %v1285 = vrot.slane %v1284, 4
    %v1286 = vadd.f32 %v1284, %v1285
    %v1287 = vrot.slane %v1286, 2
    %v1288 = vadd.f32 %v1286, %v1287
    %v1289 = vrot.slane %v1288, 1
    %v1290 = vadd.f32 %v1288, %v1289
    %v1291 = vsel %vm105, %v1209, 0.0
    %v1292 = vrot.slane %v1291, 4
    %v1293 = vadd.f32 %v1291, %v1292
    %v1294 = vrot.slane %v1293, 2
    %v1295 = vadd.f32 %v1293, %v1294
    %v1296 = vrot.slane %v1295, 1
    %v1297 = vadd.f32 %v1295, %v1296
    %v1298 = vsel %vm105, %v1210, 0.0
    %v1299 = vrot.slane %v1298, 4
    %v1300 = vadd.f32 %v1298, %v1299
    %v1301 = vrot.slane %v1300, 2
    %v1302 = vadd.f32 %v1300, %v1301
    %v1303 = vrot.slane %v1302, 1
    %v1304 = vadd.f32 %v1302, %v1303
    %v1305 = vsel %vm105, %v1211, 0.0
    %v1306 = vrot.slane %v1305, 4
    %v1307 = vadd.f32 %v1305, %v1306
    %v1308 = vrot.slane %v1307, 2
    %v1309 = vadd.f32 %v1307, %v1308
    %v1310 = vrot.slane %v1309, 1
    %v1311 = vadd.f32 %v1309, %v1310
    %v1312 = vsel %vm105, %v1212, 0.0
    %v1313 = vrot.slane %v1312, 4
    %v1314 = vadd.f32 %v1312, %v1313
    %v1315 = vrot.slane %v1314, 2
    %v1316 = vadd.f32 %v1314, %v1315
    %v1317 = vrot.slane %v1316, 1
    %v1318 = vadd.f32 %v1316, %v1317
    %v1319 = vsel %vm105, %v1213, 0.0
    %v1320 = vrot.slane %v1319, 4
    %v1321 = vadd.f32 %v1319, %v1320
    %v1322 = vrot.slane %v1321, 2
    %v1323 = vadd.f32 %v1321, %v1322
    %v1324 = vrot.slane %v1323, 1
    %v1325 = vadd.f32 %v1323, %v1324
    %v1326 = vadd.f32 %v1220, 0.0
    %v1327 = vadd.f32 %v1227, 0.0
    %v1328 = vadd.f32 %v1234, 0.0
    %v1329 = vadd.f32 %v1241, 0.0
    %v1330 = vadd.f32 %v1248, 0.0
    %v1331 = vadd.f32 %v1255, 0.0
    %v1332 = vadd.f32 %v1262, 0.0
    %v1333 = vadd.f32 %v1269, 0.0
    %v1334 = vadd.f32 %v1276, 0.0
    %v1335 = vadd.f32 %v1283, 0.0
    %v1336 = vadd.f32 %v1290, 0.0
    %v1337 = vadd.f32 %v1297, 0.0
    %v1338 = vadd.f32 %v1304, 0.0
    %v1339 = vadd.f32 %v1311, 0.0
    %v1340 = vadd.f32 %v1318, 0.0
    %v1341 = vadd.f32 %v1325, 0.0
    %v1358 = vsel %vm399, %v1327, %v1326
    %v1359 = vsel %vm401, %v1328, %v1358
    %v1360 = vsel %vm403, %v1329, %v1359
    %v1361 = vsel %vm405, %v1330, %v1360
    %v1362 = vsel %vm407, %v1331, %v1361
    %v1363 = vsel %vm409, %v1332, %v1362
    %v1364 = vsel %vm411, %v1333, %v1363
    %v1365 = vsel %vm399, %v1335, %v1334
    %v1366 = vsel %vm401, %v1336, %v1365
    %v1367 = vsel %vm403, %v1337, %v1366
    %v1368 = vsel %vm405, %v1338, %v1367
    %v1369 = vsel %vm407, %v1339, %v1368
    %v1370 = vsel %vm409, %v1340, %v1369
    %v1371 = vsel %vm411, %v1341, %v1370
    %v1372 = vsel %vm105, %v1364, 0
    %v1374 = vsel %vm105, %v1371, 0
    %1376 = vmatprep.subr.mxu0 0.0
    %1377 = vmatpush1.msra.mxu0 %v97
    %1378 = vmatprep.subr.mxu0 0.0
    %1379 = vmatpush1.msra.mxu0 %v98
    %1380 = vmatprep.subr.mxu0 0.0
    %1381 = vmatpush1.msra.mxu0 0.0
    %1382 = vmatprep.subr.mxu0 0.0
    %1383 = vmatpush1.msra.mxu0 0.0
    %1384 = vmatprep.subr.mxu0 0.0
    %1385 = vmatpush1.msra.mxu0 0.0
    %1386 = vmatprep.subr.mxu0 0.0
    %1387 = vmatpush1.msra.mxu0 0.0
    %1388 = vmatprep.subr.mxu0 0.0
    %1389 = vmatpush1.msra.mxu0 0.0
    %1390 = vmatprep.subr.mxu0 0.0
    %1391 = vmatpush1.msra.mxu0 0.0
    %1392 = vmatprep.subr.mxu0 0.0
    %1393 = vmatpush1.msra.mxu0 0.0
    %1394 = vmatprep.subr.mxu0 0.0
    %1395 = vmatpush1.msra.mxu0 0.0
    %1396 = vmatprep.subr.mxu0 0.0
    %1397 = vmatpush1.msra.mxu0 0.0
    %1398 = vmatprep.subr.mxu0 0.0
    %1399 = vmatpush1.msra.mxu0 0.0
    %1400 = vmatprep.subr.mxu0 0.0
    %1401 = vmatpush1.msra.mxu0 0.0
    %1402 = vmatprep.subr.mxu0 0.0
    %1403 = vmatpush1.msra.mxu0 0.0
    %1404 = vmatprep.subr.mxu0 0.0
    %1405 = vmatpush1.msra.mxu0 0.0
    %1406 = vmatprep.subr.mxu0 0.0
    %1407 = vmatpush1.msra.mxu0 0.0
    %1408 = vmatprep.subr.mxu0 0.0
    %1409 = vmatpush1.msra.mxu0 0.0
    %1410 = vmatprep.subr.mxu0 0.0
    %1411 = vmatpush1.msra.mxu0 0.0
    %1412 = vmatprep.subr.mxu0 0.0
    %1413 = vmatpush1.msra.mxu0 0.0
    %1414 = vmatprep.subr.mxu0 0.0
    %1415 = vmatpush1.msra.mxu0 0.0
    %1416 = vmatprep.subr.mxu0 0.0
    %1417 = vmatpush1.msra.mxu0 0.0
    %1418 = vmatprep.subr.mxu0 0.0
    %1419 = vmatpush1.msra.mxu0 0.0
    %1420 = vmatprep.subr.mxu0 0.0
    %1421 = vmatpush1.msra.mxu0 0.0
    %1422 = vmatprep.subr.mxu0 0.0
    %1423 = vmatpush1.msra.mxu0 0.0
    %1424 = vmatprep.subr.mxu0 0.0
    %1425 = vmatpush1.msra.mxu0 0.0
    %1426 = vmatprep.subr.mxu0 0.0
    %1427 = vmatpush1.msra.mxu0 0.0
    %1428 = vmatprep.subr.mxu0 0.0
    %1429 = vmatpush1.msra.mxu0 0.0
    %1430 = vmatprep.subr.mxu0 0.0
    %1431 = vmatpush1.msra.mxu0 0.0
    %1432 = vmatprep.subr.mxu0 0.0
    %1433 = vmatpush1.msra.mxu0 0.0
    %1434 = vmatprep.subr.mxu0 0.0
    %1435 = vmatpush1.msra.mxu0 0.0
    %1436 = vmatprep.subr.mxu0 0.0
    %1437 = vmatpush1.msra.mxu0 0.0
    %1438 = vmatprep.subr.mxu0 0.0
    %1439 = vmatpush1.msra.mxu0 0.0
    %1440 = vmatprep.mubr.f32.mxu0 0.0
    %1441 = vmatmul.mubr.f32.gmra.mrb[0].mxu0 %v1372
    %v1442 = vpop.f32.mrb[0].mxu0
    %v1443 = vadd.f32 0.0, %v1442
    %v1444 = vpop.f32.mrb[0].mxu0
    %1445 = vmatprep.mubr.f32.mxu0 0.0
    %1446 = vmatmul.mubr.f32.gmra.mrb[0].mxu0 %v1374
    %v1447 = vpop.f32.mrb[0].mxu0
    %v1448 = vadd.f32 0.0, %v1447
    %v1449 = vpop.f32.mrb[0].mxu0
    %1450 = vdwg.mxu0
    %1451 = vmatprep.subr.mxu0 0.0
    %1452 = vmatpush1.msra.mxu0 %v95
    %1453 = vmatprep.subr.mxu0 0.0
    %1454 = vmatpush1.msra.mxu0 %v96
    %1455 = vmatprep.subr.mxu0 0.0
    %1456 = vmatpush1.msra.mxu0 0.0
    %1457 = vmatprep.subr.mxu0 0.0
    %1458 = vmatpush1.msra.mxu0 0.0
    %1459 = vmatprep.subr.mxu0 0.0
    %1460 = vmatpush1.msra.mxu0 0.0
    %1461 = vmatprep.subr.mxu0 0.0
    %1462 = vmatpush1.msra.mxu0 0.0
    %1463 = vmatprep.subr.mxu0 0.0
    %1464 = vmatpush1.msra.mxu0 0.0
    %1465 = vmatprep.subr.mxu0 0.0
    %1466 = vmatpush1.msra.mxu0 0.0
    %1467 = vmatprep.subr.mxu0 0.0
    %1468 = vmatpush1.msra.mxu0 0.0
    %1469 = vmatprep.subr.mxu0 0.0
    %1470 = vmatpush1.msra.mxu0 0.0
    %1471 = vmatprep.subr.mxu0 0.0
    %1472 = vmatpush1.msra.mxu0 0.0
    %1473 = vmatprep.subr.mxu0 0.0
    %1474 = vmatpush1.msra.mxu0 0.0
    %1475 = vmatprep.subr.mxu0 0.0
    %1476 = vmatpush1.msra.mxu0 0.0
    %1477 = vmatprep.subr.mxu0 0.0
    %1478 = vmatpush1.msra.mxu0 0.0
    %1479 = vmatprep.subr.mxu0 0.0
    %1480 = vmatpush1.msra.mxu0 0.0
    %1481 = vmatprep.subr.mxu0 0.0
    %1482 = vmatpush1.msra.mxu0 0.0
    %1483 = vmatprep.subr.mxu0 0.0
    %1484 = vmatpush1.msra.mxu0 0.0
    %1485 = vmatprep.subr.mxu0 0.0
    %1486 = vmatpush1.msra.mxu0 0.0
    %1487 = vmatprep.subr.mxu0 0.0
    %1488 = vmatpush1.msra.mxu0 0.0
    %1489 = vmatprep.subr.mxu0 0.0
    %1490 = vmatpush1.msra.mxu0 0.0
    %1491 = vmatprep.subr.mxu0 0.0
    %1492 = vmatpush1.msra.mxu0 0.0
    %1493 = vmatprep.subr.mxu0 0.0
    %1494 = vmatpush1.msra.mxu0 0.0
    %1495 = vmatprep.subr.mxu0 0.0
    %1496 = vmatpush1.msra.mxu0 0.0
    %1497 = vmatprep.subr.mxu0 0.0
    %1498 = vmatpush1.msra.mxu0 0.0
    %1499 = vmatprep.subr.mxu0 0.0
    %1500 = vmatpush1.msra.mxu0 0.0
    %1501 = vmatprep.subr.mxu0 0.0
    %1502 = vmatpush1.msra.mxu0 0.0
    %1503 = vmatprep.subr.mxu0 0.0
    %1504 = vmatpush1.msra.mxu0 0.0
    %1505 = vmatprep.subr.mxu0 0.0
    %1506 = vmatpush1.msra.mxu0 0.0
    %1507 = vmatprep.subr.mxu0 0.0
    %1508 = vmatpush1.msra.mxu0 0.0
    %1509 = vmatprep.subr.mxu0 0.0
    %1510 = vmatpush1.msra.mxu0 0.0
    %1511 = vmatprep.subr.mxu0 0.0
    %1512 = vmatpush1.msra.mxu0 0.0
    %1513 = vmatprep.subr.mxu0 0.0
    %1514 = vmatpush1.msra.mxu0 0.0
    %1515 = vmatprep.mubr.f32.mxu0 0.0
    %1516 = vmatmul.mubr.f32.gmra.mrb[0].mxu0 %v1066
    %v1517 = vpop.f32.mrb[0].mxu0
    %v1518 = vadd.f32 %v1443, %v1517
    %v1519 = vpop.f32.mrb[0].mxu0
    %1520 = vmatprep.mubr.f32.mxu0 0.0
    %1521 = vmatmul.mubr.f32.gmra.mrb[0].mxu0 %v1069
    %v1522 = vpop.f32.mrb[0].mxu0
    %v1523 = vadd.f32 %v1448, %v1522
    %v1524 = vpop.f32.mrb[0].mxu0
    %1525 = vdwg.mxu0
    %v1526 = vadd.f32 %v1518, %v578
    %v1527 = vadd.f32 %v1523, %v578
    %v1528 = vmax.f32 %v1526, 0.0
    %v1529 = vmax.f32 %v1527, 0.0
    %v1530 = vsel %vm594, %v1528, %v89
    %v1531 = vsel %vm595, %v1529, %v90
    %1532 = vmatprep.subr.mxu0 0.0
    %1533 = vmatpush1.msra.mxu0 %v102
    %1534 = vmatprep.subr.mxu0 0.0
    %1535 = vmatpush1.msra.mxu0 %v103
    %1536 = vmatprep.subr.mxu0 0.0
    %1537 = vmatpush1.msra.mxu0 0.0
    %1538 = vmatprep.subr.mxu0 0.0
    %1539 = vmatpush1.msra.mxu0 0.0
    %1540 = vmatprep.subr.mxu0 0.0
    %1541 = vmatpush1.msra.mxu0 0.0
    %1542 = vmatprep.subr.mxu0 0.0
    %1543 = vmatpush1.msra.mxu0 0.0
    %1544 = vmatprep.subr.mxu0 0.0
    %1545 = vmatpush1.msra.mxu0 0.0
    %1546 = vmatprep.subr.mxu0 0.0
    %1547 = vmatpush1.msra.mxu0 0.0
    %1548 = vmatprep.subr.mxu0 0.0
    %1549 = vmatpush1.msra.mxu0 0.0
    %1550 = vmatprep.subr.mxu0 0.0
    %1551 = vmatpush1.msra.mxu0 0.0
    %1552 = vmatprep.subr.mxu0 0.0
    %1553 = vmatpush1.msra.mxu0 0.0
    %1554 = vmatprep.subr.mxu0 0.0
    %1555 = vmatpush1.msra.mxu0 0.0
    %1556 = vmatprep.subr.mxu0 0.0
    %1557 = vmatpush1.msra.mxu0 0.0
    %1558 = vmatprep.subr.mxu0 0.0
    %1559 = vmatpush1.msra.mxu0 0.0
    %1560 = vmatprep.subr.mxu0 0.0
    %1561 = vmatpush1.msra.mxu0 0.0
    %1562 = vmatprep.subr.mxu0 0.0
    %1563 = vmatpush1.msra.mxu0 0.0
    %1564 = vmatprep.subr.mxu0 0.0
    %1565 = vmatpush1.msra.mxu0 0.0
    %1566 = vmatprep.subr.mxu0 0.0
    %1567 = vmatpush1.msra.mxu0 0.0
    %1568 = vmatprep.subr.mxu0 0.0
    %1569 = vmatpush1.msra.mxu0 0.0
    %1570 = vmatprep.subr.mxu0 0.0
    %1571 = vmatpush1.msra.mxu0 0.0
    %1572 = vmatprep.subr.mxu0 0.0
    %1573 = vmatpush1.msra.mxu0 0.0
    %1574 = vmatprep.subr.mxu0 0.0
    %1575 = vmatpush1.msra.mxu0 0.0
    %1576 = vmatprep.subr.mxu0 0.0
    %1577 = vmatpush1.msra.mxu0 0.0
    %1578 = vmatprep.subr.mxu0 0.0
    %1579 = vmatpush1.msra.mxu0 0.0
    %1580 = vmatprep.subr.mxu0 0.0
    %1581 = vmatpush1.msra.mxu0 0.0
    %1582 = vmatprep.subr.mxu0 0.0
    %1583 = vmatpush1.msra.mxu0 0.0
    %1584 = vmatprep.subr.mxu0 0.0
    %1585 = vmatpush1.msra.mxu0 0.0
    %1586 = vmatprep.subr.mxu0 0.0
    %1587 = vmatpush1.msra.mxu0 0.0
    %1588 = vmatprep.subr.mxu0 0.0
    %1589 = vmatpush1.msra.mxu0 0.0
    %1590 = vmatprep.subr.mxu0 0.0
    %1591 = vmatpush1.msra.mxu0 0.0
    %1592 = vmatprep.subr.mxu0 0.0
    %1593 = vmatpush1.msra.mxu0 0.0
    %1594 = vmatprep.subr.mxu0 0.0
    %1595 = vmatpush1.msra.mxu0 0.0
    %1596 = vmatprep.mubr.f32.mxu0 0.0
    %1597 = vmatmul.mubr.f32.gmra.mrb[0].mxu0 %v107
    %v1598 = vpop.f32.mrb[0].mxu0
    %v1599 = vadd.f32 0.0, %v1598
    %v1600 = vpop.f32.mrb[0].mxu0
    %1601 = vmatprep.mubr.f32.mxu0 0.0
    %1602 = vmatmul.mubr.f32.gmra.mrb[0].mxu0 %v110
    %v1603 = vpop.f32.mrb[0].mxu0
    %v1604 = vadd.f32 0.0, %v1603
    %v1605 = vpop.f32.mrb[0].mxu0
    %1606 = vdwg.mxu0
    %v1608 = vsel %vm105, %v1530, 0
    %v1611 = vsel %vm105, %v1531, 0
    %1613 = vmatprep.subr.mxu0 0.0
    %1614 = vmatpush1.msra.mxu0 %v100
    %1615 = vmatprep.subr.mxu0 0.0
    %1616 = vmatpush1.msra.mxu0 %v101
    %1617 = vmatprep.subr.mxu0 0.0
    %1618 = vmatpush1.msra.mxu0 0.0
    %1619 = vmatprep.subr.mxu0 0.0
    %1620 = vmatpush1.msra.mxu0 0.0
    %1621 = vmatprep.subr.mxu0 0.0
    %1622 = vmatpush1.msra.mxu0 0.0
    %1623 = vmatprep.subr.mxu0 0.0
    %1624 = vmatpush1.msra.mxu0 0.0
    %1625 = vmatprep.subr.mxu0 0.0
    %1626 = vmatpush1.msra.mxu0 0.0
    %1627 = vmatprep.subr.mxu0 0.0
    %1628 = vmatpush1.msra.mxu0 0.0
    %1629 = vmatprep.subr.mxu0 0.0
    %1630 = vmatpush1.msra.mxu0 0.0
    %1631 = vmatprep.subr.mxu0 0.0
    %1632 = vmatpush1.msra.mxu0 0.0
    %1633 = vmatprep.subr.mxu0 0.0
    %1634 = vmatpush1.msra.mxu0 0.0
    %1635 = vmatprep.subr.mxu0 0.0
    %1636 = vmatpush1.msra.mxu0 0.0
    %1637 = vmatprep.subr.mxu0 0.0
    %1638 = vmatpush1.msra.mxu0 0.0
    %1639 = vmatprep.subr.mxu0 0.0
    %1640 = vmatpush1.msra.mxu0 0.0
    %1641 = vmatprep.subr.mxu0 0.0
    %1642 = vmatpush1.msra.mxu0 0.0
    %1643 = vmatprep.subr.mxu0 0.0
    %1644 = vmatpush1.msra.mxu0 0.0
    %1645 = vmatprep.subr.mxu0 0.0
    %1646 = vmatpush1.msra.mxu0 0.0
    %1647 = vmatprep.subr.mxu0 0.0
    %1648 = vmatpush1.msra.mxu0 0.0
    %1649 = vmatprep.subr.mxu0 0.0
    %1650 = vmatpush1.msra.mxu0 0.0
    %1651 = vmatprep.subr.mxu0 0.0
    %1652 = vmatpush1.msra.mxu0 0.0
    %1653 = vmatprep.subr.mxu0 0.0
    %1654 = vmatpush1.msra.mxu0 0.0
    %1655 = vmatprep.subr.mxu0 0.0
    %1656 = vmatpush1.msra.mxu0 0.0
    %1657 = vmatprep.subr.mxu0 0.0
    %1658 = vmatpush1.msra.mxu0 0.0
    %1659 = vmatprep.subr.mxu0 0.0
    %1660 = vmatpush1.msra.mxu0 0.0
    %1661 = vmatprep.subr.mxu0 0.0
    %1662 = vmatpush1.msra.mxu0 0.0
    %1663 = vmatprep.subr.mxu0 0.0
    %1664 = vmatpush1.msra.mxu0 0.0
    %1665 = vmatprep.subr.mxu0 0.0
    %1666 = vmatpush1.msra.mxu0 0.0
    %1667 = vmatprep.subr.mxu0 0.0
    %1668 = vmatpush1.msra.mxu0 0.0
    %1669 = vmatprep.subr.mxu0 0.0
    %1670 = vmatpush1.msra.mxu0 0.0
    %1671 = vmatprep.subr.mxu0 0.0
    %1672 = vmatpush1.msra.mxu0 0.0
    %1673 = vmatprep.subr.mxu0 0.0
    %1674 = vmatpush1.msra.mxu0 0.0
    %1675 = vmatprep.subr.mxu0 0.0
    %1676 = vmatpush1.msra.mxu0 0.0
    %1677 = vmatprep.mubr.f32.mxu0 0.0
    %1678 = vmatmul.mubr.f32.gmra.mrb[0].mxu0 %v1608
    %v1679 = vpop.f32.mrb[0].mxu0
    %v1680 = vadd.f32 %v1599, %v1679
    %v1681 = vpop.f32.mrb[0].mxu0
    %1682 = vmatprep.mubr.f32.mxu0 0.0
    %1683 = vmatmul.mubr.f32.gmra.mrb[0].mxu0 %v1611
    %v1684 = vpop.f32.mrb[0].mxu0
    %v1685 = vadd.f32 %v1604, %v1684
    %v1686 = vpop.f32.mrb[0].mxu0
    %1687 = vdwg.mxu0
    %v1689 = vlaneseq
    %v1690 = vshrl.u32 %v1689, 7
    %v1691 = vsub.s32 0, %v1690
    %v1692 = vrot.slane %v104, %v1691
    %v1694 = vadd.f32 %v1680, %v1692
    %v1695 = vadd.f32 %v1685, %v1692
    %v1696 = vmax.f32 %v1694, 0.0
    %v1697 = vmax.f32 %v1695, 0.0
    %v1698 = vsel %vm594, %v1696, 0.0
    %v1699 = vsel %vm595, %v1697, 0.0
    %vm1700 = vcmask 64512
    %v1701 = vsel %vm1700, %v1698, 0.0
    %v1702 = vrot.slane %v1701, 4
    %v1703 = vadd.f32 %v1701, %v1702
    %v1704 = vrot.slane %v1703, 2
    %v1705 = vadd.f32 %v1703, %v1704
    %v1706 = vrot.slane %v1705, 1
    %v1707 = vadd.f32 %v1705, %v1706
    %v1708 = vsel %vm1700, %v1699, 0.0
    %v1709 = vrot.slane %v1708, 4
    %v1710 = vadd.f32 %v1708, %v1709
    %v1711 = vrot.slane %v1710, 2
    %v1712 = vadd.f32 %v1710, %v1711
    %v1713 = vrot.slane %v1712, 1
    %v1714 = vadd.f32 %v1712, %v1713
    %v1717 = vsel %vm399, %v1714, %v1707
    %vm1719 = vcmask 58368
    %1720 = vst.msk [vmem:[#allocation11] sm:$0x3] %vm1719, %v1717
    // Predicated region
    $region58: #{tpu_custom_call.1} parent=1 // pred_check
      _
    $region59: #{tpu_custom_call.1} parent=1 // pred_check_branch
      %1722 = sbr.rel (0) target = $region61
    $region60: #{tpu_custom_call.1} parent=1 // pred_region
      %s1724 = ssub.s32 32, 32
      %1725 = vsyncadd [#allocation5], %s1724
      %s1727 = sshll.u32 [#allocation11], 4
      %s1728 = int_to_ptr.vmem [resolvable:$true] %s1727
      %1730 = dma.vmem_to_hbm [thread:$0]  %s1728, 32, %s10, [#allocation5]
    $region61: #{tpu_custom_call.1} parent=1 // pred_fallthru
      _
    // Predicated region
    $region62: #{tpu_custom_call.1} parent=1 // pred_check
      _
    $region63: #{tpu_custom_call.1} parent=1 // pred_check_branch
      %1732 = sbr.rel (0) target = $region65
    $region64: #{tpu_custom_call.1} parent=1 // pred_region
      %1733 = dma.done [#allocation5], 32
    $region65: #{tpu_custom_call.1} parent=1 // pred_fallthru
      _
    %1734 = vsyncpa [#allocation4], 1
    %1735 = vsyncpa [#allocation7], 1
    %1736 = vsyncpa [#allocation10], 1
    %1737 = vsyncpa [#allocation5], 1

</llo_original>
